<compile_context>
chip_gen: v6e
topology: v6e:2x2x1
jax: 0.10.0
libtpu: 0.0.40
codegen_flags: <defaults>
</compile_context>

<pallas_src>
import functools

import jax
import jax.numpy as jnp
from jax.experimental import pallas as pl
from jax.experimental.pallas import tpu as pltpu

LANE = 128
VMEM_LIMIT = 40 * 1024 * 1024          # conservative: fits v7x's 64 MiB physical VMEM
XW_RESIDENT_BYTES = 12 * 1024 * 1024   # resident-XW cap (x2 pipeline buffers worst case)


def _round_up(x, m):
    return ((x + m - 1) // m) * m


def _pad2d(x, rows, cols):
    r, c = x.shape
    return jnp.pad(x, ((0, rows - r), (0, cols - c)))


def _tiles_for(n):
    """(n_pad, tm, tk) for the N x N adjacency stream.

    - row ('parallel') axis always gets >=2 tiles so v7x's two TensorCores are
      both used (irrelevant but harmless on single-TC v5e/v6e);
    - large graphs use 512/2048 tiles (measured ~85% of HBM roofline vs ~63%
      at 256), int8 A tile = 1 MiB so double-buffering is cheap.
    """
    n_pad = _round_up(n, LANE)
    if n_pad <= 1024:
        tm = max(n_pad // 2, 64)   # >=2 row tiles; multiple of 32 (int8 sublane tiling)
        tk = n_pad                 # single reduction step
    else:
        n_pad = _round_up(n, 512)
        tm = 512
        tk = max(t for t in (2048, 1024, 512) if n_pad % t == 0)
    return n_pad, tm, tk


# ---------------------------------------------------------------------------
# First-layer projection:  XW0_scaled = d^{-1/2} * (X @ W0)   (bf16 out)
# ---------------------------------------------------------------------------
def _project_kernel(x_ref, w_ref, dinv_ref, o_ref):
    xw = jnp.dot(x_ref[...], w_ref[...], preferred_element_type=jnp.float32)
    o_ref[...] = (xw * dinv_ref[...]).astype(o_ref.dtype)


def project_scaled(x, w, dinv, *, tm):
    n_pad, f_in = x.shape
    f_out = w.shape[1]
    return pl.pallas_call(
        _project_kernel,
        out_shape=jax.ShapeDtypeStruct((n_pad, f_out), jnp.bfloat16),
        grid_spec=pltpu.PrefetchScalarGridSpec(
            num_scalar_prefetch=0,
            grid=(n_pad // tm,),
            in_specs=[
                pl.BlockSpec((tm, f_in), lambda i: (i, 0)),
                pl.BlockSpec((f_in, f_out), lambda i: (0, 0)),
                pl.BlockSpec((tm, 1), lambda i: (i, 0)),
            ],
            out_specs=pl.BlockSpec((tm, f_out), lambda i: (i, 0)),
        ),
        compiler_params=pltpu.CompilerParams(
            dimension_semantics=("parallel",),
            vmem_limit_bytes=VMEM_LIMIT,
        ),
    )(x, w, dinv)


# ---------------------------------------------------------------------------
# Aggregation:  acc = A @ XW_scaled  (int8 A cast to bf16 in-kernel, f32 acc)
# Finalize is either:
#   * fused:  o = d^{-1/2} * ( ReLU(acc * d^{-1/2} + b) @ W_next )   (bf16 out)
#   * final:  o = ReLU(acc * d^{-1/2} + b)                           (f32 out)
# ---------------------------------------------------------------------------
def _acc_step(a_ref, xw_ref, acc_ref, *, tk, resident):
    k = pl.program_id(1)

    @pl.when(k == 0)
    def _():
        acc_ref[...] = jnp.zeros_like(acc_ref)

    # int8 0/1 -> bf16 right before the dot (free VPU filler; halves A's HBM bytes).
    a_tile = a_ref[...].astype(jnp.float32).astype(jnp.bfloat16)
    if resident:
        start = pl.multiple_of(k * tk, LANE)
        xw_tile = xw_ref[pl.ds(start, tk), :]
    else:
        xw_tile = xw_ref[...]
    acc_ref[...] += jnp.dot(a_tile, xw_tile, preferred_element_type=jnp.float32)


def _agg_final_kernel(a_ref, xw_ref, dinv_ref, b_ref, o_ref, acc_ref,
                      *, tk, resident):
    _acc_step(a_ref, xw_ref, acc_ref, tk=tk, resident=resident)

    @pl.when(pl.program_id(1) == pl.num_programs(1) - 1)
    def _():
        y = acc_ref[...] * dinv_ref[...] + b_ref[...]
        o_ref[...] = jnp.maximum(y, 0.0).astype(o_ref.dtype)


def _agg_project_kernel(a_ref, xw_ref, dinv_ref, b_ref, wn_ref, o_ref, acc_ref,
                        *, tk, resident):
    _acc_step(a_ref, xw_ref, acc_ref, tk=tk, resident=resident)

    @pl.when(pl.program_id(1) == pl.num_programs(1) - 1)
    def _():
        # Padded rows of h become ReLU(b) (nonzero if bias != 0); this is safe
        # because A's padded COLUMNS are zero in all later aggregations.
        h = jnp.maximum(acc_ref[...] * dinv_ref[...] + b_ref[...], 0.0)
        xw_next = jnp.dot(h, wn_ref[...], preferred_element_type=jnp.float32)
        o_ref[...] = (xw_next * dinv_ref[...]).astype(o_ref.dtype)


def aggregate(a_i8, xw, dinv, bias, w_next=None, *, tm, tk):
    n_pad = a_i8.shape[0]
    f_out = xw.shape[1]

    resident = n_pad * f_out * 2 <= XW_RESIDENT_BYTES
    if resident:
        # Fetched once (constant block index), stays in VMEM; sliced in-kernel.
        xw_spec = pl.BlockSpec((n_pad, f_out), lambda i, k: (0, 0))
    else:
        # TODO(synk): for huge graphs raise tm instead to cut the XW re-stream.
        xw_spec = pl.BlockSpec((tk, f_out), lambda i, k: (k, 0))

    in_specs = [
        pl.BlockSpec((tm, tk), lambda i, k: (i, k)),     # int8 adjacency tile
        xw_spec,                                         # scaled XW (bf16)
        pl.BlockSpec((tm, 1), lambda i, k: (i, 0)),      # d^{-1/2} rows
        pl.BlockSpec((1, f_out), lambda i, k: (0, 0)),   # bias (broadcast)
    ]
    operands = [a_i8, xw, dinv, bias]

    if w_next is None:
        kernel = functools.partial(_agg_final_kernel, tk=tk, resident=resident)
        out_shape = jax.ShapeDtypeStruct((n_pad, f_out), jnp.float32)
        out_spec = pl.BlockSpec((tm, f_out), lambda i, k: (i, 0))
    else:
        f_next = w_next.shape[1]
        in_specs.append(pl.BlockSpec((f_out, f_next), lambda i, k: (0, 0)))
        operands.append(w_next)
        kernel = functools.partial(_agg_project_kernel, tk=tk, resident=resident)
        out_shape = jax.ShapeDtypeStruct((n_pad, f_next), jnp.bfloat16)
        out_spec = pl.BlockSpec((tm, f_next), lambda i, k: (i, 0))

    return pl.pallas_call(
        kernel,
        out_shape=out_shape,
        grid_spec=pltpu.PrefetchScalarGridSpec(
            num_scalar_prefetch=0,
            grid=(n_pad // tm, n_pad // tk),
            in_specs=in_specs,
            out_specs=out_spec,
            scratch_shapes=[pltpu.VMEM((tm, f_out), jnp.float32)],
        ),
        compiler_params=pltpu.CompilerParams(
            dimension_semantics=("parallel", "arbitrary"),
            vmem_limit_bytes=VMEM_LIMIT,
        ),
    )(*operands)


# ---------------------------------------------------------------------------
# Full GCN forward
# ---------------------------------------------------------------------------
def init_gcn_params(key, in_dim, out_dim, num_layers=2):
    """Glorot-uniform weights + zero bias matching GCN.__init__ layer shapes."""
    assert num_layers >= 2
    dims = [in_dim] + [out_dim * 2] * (num_layers - 1) + [out_dim]
    params = []
    for i in range(num_layers):
        key, sub = jax.random.split(key)
        fan_in, fan_out = dims[i], dims[i + 1]
        limit = jnp.sqrt(6.0 / (fan_in + fan_out))
        w = jax.random.uniform(sub, (fan_in, fan_out), jnp.float32, -limit, limit)
        b = jnp.zeros((fan_out,), jnp.float32)
        params.append((w, b))
    return params


def preprocess_graph(adj, n_pad):
    """One-time graph prep (hoisted out of the per-forward jit for static graphs):
    int8 padded adjacency + padded d^{-1/2} column vector."""
    n = adj.shape[0]
    a_i8 = adj.astype(jnp.int8)                                    # 0/1 exact, 4x narrower
    # DGL norm='both' with degrees clamped to >= 1 (out-degree; matches DGL for
    # symmetric adjacency — directed graphs would need in-degree on the left).
    deg = jnp.maximum(jnp.sum(a_i8, axis=1, dtype=jnp.float32), 1.0)
    dinv = jnp.pad(1.0 / jnp.sqrt(deg), (0, n_pad - n), constant_values=1.0)
    a_pad = jnp.pad(a_i8, ((0, n_pad - n), (0, n_pad - n)))        # zero-padded rows/cols
    return a_pad, dinv.reshape(n_pad, 1)


def gcn_forward(a_pad, dinv, feat, *, params, n_nodes, tm, tk):
    n_pad = a_pad.shape[0]
    f_in0 = feat.shape[1]
    h = _pad2d(feat.astype(jnp.float32), n_pad, _round_up(f_in0, LANE))

    padded = []
    for w, b in params:
        f_i, f_o = w.shape
        f_i_p, f_o_p = _round_up(f_i, LANE), _round_up(f_o, LANE)
        padded.append((
            _pad2d(w.astype(jnp.float32), f_i_p, f_o_p),
            jnp.pad(b.astype(jnp.float32), (0, f_o_p - f_o)).reshape(1, f_o_p),
        ))

    # Layer 0 projection (reassociated matmul: cheap N*F_in*F_out first).
    xw = project_scaled(h, padded[0][0], dinv, tm=tm)              # [n_pad, f_o0] bf16

    # Layers 0..L-2: aggregate + fused projection into the next layer's XW
    # (intermediate H never touches HBM).
    for l in range(len(params) - 1):
        xw = aggregate(a_pad, xw, dinv, padded[l][1], padded[l + 1][0], tm=tm, tk=tk)

    # Last layer: plain aggregation finalize (f32 output).
    out = aggregate(a_pad, xw, dinv, padded[-1][1], tm=tm, tk=tk)

    out_dim_last = params[-1][0].shape[1]
    return out[:n_nodes, :out_dim_last]


if __name__ == "__main__":
    key = jax.random.PRNGKey(0)
    k_adj, k_feat, k_param = jax.random.split(key, 3)

    num_nodes = 16
    in_dim = 8
    out_dim = 4
    num_layers = 2

    # deterministic random undirected graph (dense adjacency, no self loops)
    logits = jax.random.uniform(k_adj, (num_nodes, num_nodes))
    adj = (logits < 0.3).astype(jnp.float32)
    adj = jnp.maximum(adj, adj.T) * (1.0 - jnp.eye(num_nodes, dtype=jnp.float32))

    feat = jax.random.normal(k_feat, (num_nodes, in_dim), jnp.float32)
    params = init_gcn_params(k_param, in_dim, out_dim, num_layers)

    n_pad, tm, tk = _tiles_for(num_nodes)
    a_pad, dinv = preprocess_graph(adj, n_pad)   # once per graph (static)

    fwd = jax.jit(functools.partial(
        gcn_forward, params=params, n_nodes=num_nodes, tm=tm, tk=tk))
    out = jax.block_until_ready(fwd(a_pad, dinv, feat))

    # Reference mirrors the kernel's dtype strategy (0/1 adjacency exact, bf16
    # XW streams, f32 accumulation) so the comparison stays tight.
    HIGH = jax.lax.Precision.HIGHEST
    deg_r = jnp.maximum(jnp.sum(adj, axis=1), 1.0)
    dinv_r = (1.0 / jnp.sqrt(deg_r))[:, None]
    xw_r = jnp.matmul(feat, params[0][0], precision=HIGH) * dinv_r
    xw_r = xw_r.astype(jnp.bfloat16).astype(jnp.float32)
    for l in range(num_layers - 1):
        h_r = jnp.maximum(
            jnp.matmul(adj, xw_r, precision=HIGH) * dinv_r + params[l][1][None, :], 0.0)
        xw_r = jnp.matmul(h_r, params[l + 1][0], precision=HIGH) * dinv_r
        xw_r = xw_r.astype(jnp.bfloat16).astype(jnp.float32)
    h_ref = jnp.maximum(
        jnp.matmul(adj, xw_r, precision=HIGH) * dinv_r + params[-1][1][None, :], 0.0)

    assert out.shape == (num_nodes, out_dim), out.shape
    max_err = float(jnp.max(jnp.abs(out - h_ref)))
    assert jnp.allclose(out, h_ref, atol=1e-3, rtol=1e-3), max_err

    print("KERNEL_OK")
</pallas_src>

<mosaic_0001>
module attributes {stable_mosaic.version = 11 : i64} {
  func.func @_project_kernel(%arg0: i32, %arg1: memref<64x128xf32, #tpu.memory_space<vmem>>, %arg2: memref<128x128xf32, #tpu.memory_space<vmem>>, %arg3: memref<64x1xf32, #tpu.memory_space<vmem>>, %arg4: memref<64x128xbf16, #tpu.memory_space<vmem>>) attributes {dimension_semantics = [#tpu.dimension_semantics<parallel>], iteration_bounds = array<i64: 2>, scalar_prefetch = 0 : i64, scratch_operands = 0 : i64, tpu.core_type = #tpu.core_type<tc>, window_params = [{transform_indices = @transform_0, window_bounds = array<i64: 64, 128>}, {pipeline_mode = #tpu.pipeline_mode<synchronous>, transform_indices = @transform_1, window_bounds = array<i64: 128, 128>}, {transform_indices = @transform_2, window_bounds = array<i64: 64, 1>}, {transform_indices = @transform_3, window_bounds = array<i64: 64, 128>}]} {
    %c0 = arith.constant 0 : index
    %c0_0 = arith.constant 0 : index
    %0 = vector.load %arg1[%c0, %c0_0] : memref<64x128xf32, #tpu.memory_space<vmem>>, vector<64x128xf32>
    %c0_1 = arith.constant 0 : index
    %c0_2 = arith.constant 0 : index
    %1 = vector.load %arg2[%c0_1, %c0_2] : memref<128x128xf32, #tpu.memory_space<vmem>>, vector<128x128xf32>
    %cst = arith.constant dense<0.000000e+00> : vector<64x128xf32>
    %2 = tpu.matmul %0, %1, %cst {dimension_numbers = #tpu.dot_dimension_numbers<[1], [0], [0], [1], [0, 0, 1, 1], [], []>} : vector<64x128xf32>, vector<128x128xf32>, vector<64x128xf32> -> vector<64x128xf32>
    %c0_3 = arith.constant 0 : index
    %c0_4 = arith.constant 0 : index
    %3 = vector.load %arg3[%c0_3, %c0_4] : memref<64x1xf32, #tpu.memory_space<vmem>>, vector<64x1xf32>
    %4 = vector.broadcast %3 : vector<64x1xf32> to vector<64x128xf32>
    %5 = arith.mulf %2, %4 : vector<64x128xf32>
    %6 = arith.truncf %5 : vector<64x128xf32> to vector<64x128xbf16>
    %c0_5 = arith.constant 0 : index
    %c0_6 = arith.constant 0 : index
    %7 = vector.load %arg4[%c0_5, %c0_6] : memref<64x128xbf16, #tpu.memory_space<vmem>>, vector<64x128xbf16>
    tpu.vector_store %arg4[%c0_5, %c0_6], %6 {strides = array<i32>} : memref<64x128xbf16, #tpu.memory_space<vmem>>, vector<64x128xbf16>,
    return
  }
  func.func @transform_0(%arg0: i32) -> (i32, i32) {
    %c0_i32 = arith.constant 0 : i32
    %c0_i32_0 = arith.constant 0 : i32
    return %arg0, %c0_i32 : i32, i32
  }
  func.func @transform_1(%arg0: i32) -> (i32, i32) {
    %c0_i32 = arith.constant 0 : i32
    %c0_i32_0 = arith.constant 0 : i32
    %c0_i32_1 = arith.constant 0 : i32
    return %c0_i32, %c0_i32_0 : i32, i32
  }
  func.func @transform_2(%arg0: i32) -> (i32, i32) {
    %c0_i32 = arith.constant 0 : i32
    %c0_i32_0 = arith.constant 0 : i32
    return %arg0, %c0_i32 : i32, i32
  }
  func.func @transform_3(%arg0: i32) -> (i32, i32) {
    %c0_i32 = arith.constant 0 : i32
    %c0_i32_0 = arith.constant 0 : i32
    return %arg0, %c0_i32 : i32, i32
  }
}

module attributes {stable_mosaic.version = 11 : i64} {
  func.func @_agg_project_kernel(%arg0: i32, %arg1: i32, %arg2: memref<64x128xi8, #tpu.memory_space<vmem>>, %arg3: memref<128x128xbf16, #tpu.memory_space<vmem>>, %arg4: memref<64x1xf32, #tpu.memory_space<vmem>>, %arg5: memref<1x128xf32, #tpu.memory_space<vmem>>, %arg6: memref<128x128xf32, #tpu.memory_space<vmem>>, %arg7: memref<64x128xbf16, #tpu.memory_space<vmem>>, %arg8: memref<64x128xf32, #tpu.memory_space<vmem>>) attributes {dimension_semantics = [#tpu.dimension_semantics<parallel>, #tpu.dimension_semantics<arbitrary>], iteration_bounds = array<i64: 2, 1>, scalar_prefetch = 0 : i64, scratch_operands = 1 : i64, tpu.core_type = #tpu.core_type<tc>, window_params = [{transform_indices = @transform_0, window_bounds = array<i64: 64, 128>}, {pipeline_mode = #tpu.pipeline_mode<synchronous>, transform_indices = @transform_1, window_bounds = array<i64: 128, 128>}, {transform_indices = @transform_2, window_bounds = array<i64: 64, 1>}, {pipeline_mode = #tpu.pipeline_mode<synchronous>, transform_indices = @transform_3, window_bounds = array<i64: 1, 128>}, {pipeline_mode = #tpu.pipeline_mode<synchronous>, transform_indices = @transform_4, window_bounds = array<i64: 128, 128>}, {transform_indices = @transform_5, window_bounds = array<i64: 64, 128>}]} {
    %c0_i32 = arith.constant 0 : i32
    %0 = arith.cmpi eq, %arg1, %c0_i32 : i32
    %1 = arith.extui %0 : i1 to i32
    %c0_i32_0 = arith.constant 0 : i32
    %2 = arith.cmpi ne, %1, %c0_i32_0 : i32
    scf.if %2 {
      %cst_9 = arith.constant 0.000000e+00 : f32
      %17 = vector.broadcast %cst_9 : f32 to vector<64x128xf32>
      %c0_10 = arith.constant 0 : index
      %c0_11 = arith.constant 0 : index
      %18 = vector.load %arg8[%c0_10, %c0_11] : memref<64x128xf32, #tpu.memory_space<vmem>>, vector<64x128xf32>
      tpu.vector_store %arg8[%c0_10, %c0_11], %17 {strides = array<i32>} : memref<64x128xf32, #tpu.memory_space<vmem>>, vector<64x128xf32>,
    } else {
    }
    %c0 = arith.constant 0 : index
    %c0_1 = arith.constant 0 : index
    %3 = vector.load %arg2[%c0, %c0_1] : memref<64x128xi8, #tpu.memory_space<vmem>>, vector<64x128xi8>
    %4 = arith.sitofp %3 : vector<64x128xi8> to vector<64x128xf32>
    %5 = arith.truncf %4 : vector<64x128xf32> to vector<64x128xbf16>
    %c128_i32 = arith.constant 128 : i32
    %6 = arith.muli %arg1, %c128_i32 : i32
    %7 = tpu.assume_multiple %6, 128 : i32
    %8 = arith.index_cast %7 : i32 to index
    %c0_2 = arith.constant 0 : index
    %9 = vector.load %arg3[%8, %c0_2] : memref<128x128xbf16, #tpu.memory_space<vmem>>, vector<128x128xbf16>
    %c0_3 = arith.constant 0 : index
    %c0_4 = arith.constant 0 : index
    %10 = vector.load %arg8[%c0_3, %c0_4] : memref<64x128xf32, #tpu.memory_space<vmem>>, vector<64x128xf32>
    %cst = arith.constant dense<0.000000e+00> : vector<64x128xf32>
    %11 = tpu.matmul %5, %9, %cst {dimension_numbers = #tpu.dot_dimension_numbers<[1], [0], [0], [1], [0, 0, 1, 1], [], []>} : vector<64x128xbf16>, vector<128x128xbf16>, vector<64x128xf32> -> vector<64x128xf32>
    %12 = arith.addf %10, %11 : vector<64x128xf32>
    %c0_5 = arith.constant 0 : index
    %c0_6 = arith.constant 0 : index
    %13 = vector.load %arg8[%c0_5, %c0_6] : memref<64x128xf32, #tpu.memory_space<vmem>>, vector<64x128xf32>
    tpu.vector_store %arg8[%c0_5, %c0_6], %12 {strides = array<i32>} : memref<64x128xf32, #tpu.memory_space<vmem>>, vector<64x128xf32>,
    %c0_i32_7 = arith.constant 0 : i32
    %14 = arith.cmpi eq, %arg1, %c0_i32_7 : i32
    %15 = arith.extui %14 : i1 to i32
    %c0_i32_8 = arith.constant 0 : i32
    %16 = arith.cmpi ne, %15, %c0_i32_8 : i32
    scf.if %16 {
      %c0_9 = arith.constant 0 : index
      %c0_10 = arith.constant 0 : index
      %17 = vector.load %arg8[%c0_9, %c0_10] : memref<64x128xf32, #tpu.memory_space<vmem>>, vector<64x128xf32>
      %c0_11 = arith.constant 0 : index
      %c0_12 = arith.constant 0 : index
      %18 = vector.load %arg4[%c0_11, %c0_12] : memref<64x1xf32, #tpu.memory_space<vmem>>, vector<64x1xf32>
      %19 = vector.broadcast %18 : vector<64x1xf32> to vector<64x128xf32>
      %20 = arith.mulf %17, %19 : vector<64x128xf32>
      %c0_13 = arith.constant 0 : index
      %c0_14 = arith.constant 0 : index
      %21 = vector.load %arg5[%c0_13, %c0_14] : memref<1x128xf32, #tpu.memory_space<vmem>>, vector<1x128xf32>
      %22 = vector.broadcast %21 : vector<1x128xf32> to vector<64x128xf32>
      %23 = arith.addf %20, %22 : vector<64x128xf32>
      %cst_15 = arith.constant 0.000000e+00 : f32
      %24 = vector.broadcast %cst_15 : f32 to vector<64x128xf32>
      %25 = arith.maximumf %23, %24 : vector<64x128xf32>
      %c0_16 = arith.constant 0 : index
      %c0_17 = arith.constant 0 : index
      %26 = vector.load %arg6[%c0_16, %c0_17] : memref<128x128xf32, #tpu.memory_space<vmem>>, vector<128x128xf32>
      %cst_18 = arith.constant dense<0.000000e+00> : vector<64x128xf32>
      %27 = tpu.matmul %25, %26, %cst_18 {dimension_numbers = #tpu.dot_dimension_numbers<[1], [0], [0], [1], [0, 0, 1, 1], [], []>} : vector<64x128xf32>, vector<128x128xf32>, vector<64x128xf32> -> vector<64x128xf32>
      %c0_19 = arith.constant 0 : index
      %c0_20 = arith.constant 0 : index
      %28 = vector.load %arg4[%c0_19, %c0_20] : memref<64x1xf32, #tpu.memory_space<vmem>>, vector<64x1xf32>
      %29 = vector.broadcast %28 : vector<64x1xf32> to vector<64x128xf32>
      %30 = arith.mulf %27, %29 : vector<64x128xf32>
      %31 = arith.truncf %30 : vector<64x128xf32> to vector<64x128xbf16>
      %c0_21 = arith.constant 0 : index
      %c0_22 = arith.constant 0 : index
      %32 = vector.load %arg7[%c0_21, %c0_22] : memref<64x128xbf16, #tpu.memory_space<vmem>>, vector<64x128xbf16>
      tpu.vector_store %arg7[%c0_21, %c0_22], %31 {strides = array<i32>} : memref<64x128xbf16, #tpu.memory_space<vmem>>, vector<64x128xbf16>,
    } else {
    }
    return
  }
  func.func @transform_0(%arg0: i32, %arg1: i32) -> (i32, i32) {
    %c0_i32 = arith.constant 0 : i32
    return %arg0, %arg1 : i32, i32
  }
  func.func @transform_1(%arg0: i32, %arg1: i32) -> (i32, i32) {
    %c0_i32 = arith.constant 0 : i32
    %c0_i32_0 = arith.constant 0 : i32
    %c0_i32_1 = arith.constant 0 : i32
    return %c0_i32, %c0_i32_0 : i32, i32
  }
  func.func @transform_2(%arg0: i32, %arg1: i32) -> (i32, i32) {
    %c0_i32 = arith.constant 0 : i32
    %c0_i32_0 = arith.constant 0 : i32
    return %arg0, %c0_i32 : i32, i32
  }
  func.func @transform_3(%arg0: i32, %arg1: i32) -> (i32, i32) {
    %c0_i32 = arith.constant 0 : i32
    %c0_i32_0 = arith.constant 0 : i32
    %c0_i32_1 = arith.constant 0 : i32
    return %c0_i32, %c0_i32_0 : i32, i32
  }
  func.func @transform_4(%arg0: i32, %arg1: i32) -> (i32, i32) {
    %c0_i32 = arith.constant 0 : i32
    %c0_i32_0 = arith.constant 0 : i32
    %c0_i32_1 = arith.constant 0 : i32
    return %c0_i32, %c0_i32_0 : i32, i32
  }
  func.func @transform_5(%arg0: i32, %arg1: i32) -> (i32, i32) {
    %c0_i32 = arith.constant 0 : i32
    %c0_i32_0 = arith.constant 0 : i32
    return %arg0, %c0_i32 : i32, i32
  }
}

module attributes {stable_mosaic.version = 11 : i64} {
  func.func @_agg_final_kernel(%arg0: i32, %arg1: i32, %arg2: memref<64x128xi8, #tpu.memory_space<vmem>>, %arg3: memref<128x128xbf16, #tpu.memory_space<vmem>>, %arg4: memref<64x1xf32, #tpu.memory_space<vmem>>, %arg5: memref<1x128xf32, #tpu.memory_space<vmem>>, %arg6: memref<64x128xf32, #tpu.memory_space<vmem>>, %arg7: memref<64x128xf32, #tpu.memory_space<vmem>>) attributes {dimension_semantics = [#tpu.dimension_semantics<parallel>, #tpu.dimension_semantics<arbitrary>], iteration_bounds = array<i64: 2, 1>, scalar_prefetch = 0 : i64, scratch_operands = 1 : i64, tpu.core_type = #tpu.core_type<tc>, window_params = [{transform_indices = @transform_0, window_bounds = array<i64: 64, 128>}, {pipeline_mode = #tpu.pipeline_mode<synchronous>, transform_indices = @transform_1, window_bounds = array<i64: 128, 128>}, {transform_indices = @transform_2, window_bounds = array<i64: 64, 1>}, {pipeline_mode = #tpu.pipeline_mode<synchronous>, transform_indices = @transform_3, window_bounds = array<i64: 1, 128>}, {transform_indices = @transform_4, window_bounds = array<i64: 64, 128>}]} {
    %c0_i32 = arith.constant 0 : i32
    %0 = arith.cmpi eq, %arg1, %c0_i32 : i32
    %1 = arith.extui %0 : i1 to i32
    %c0_i32_0 = arith.constant 0 : i32
    %2 = arith.cmpi ne, %1, %c0_i32_0 : i32
    scf.if %2 {
      %cst_9 = arith.constant 0.000000e+00 : f32
      %17 = vector.broadcast %cst_9 : f32 to vector<64x128xf32>
      %c0_10 = arith.constant 0 : index
      %c0_11 = arith.constant 0 : index
      %18 = vector.load %arg7[%c0_10, %c0_11] : memref<64x128xf32, #tpu.memory_space<vmem>>, vector<64x128xf32>
      tpu.vector_store %arg7[%c0_10, %c0_11], %17 {strides = array<i32>} : memref<64x128xf32, #tpu.memory_space<vmem>>, vector<64x128xf32>,
    } else {
    }
    %c0 = arith.constant 0 : index
    %c0_1 = arith.constant 0 : index
    %3 = vector.load %arg2[%c0, %c0_1] : memref<64x128xi8, #tpu.memory_space<vmem>>, vector<64x128xi8>
    %4 = arith.sitofp %3 : vector<64x128xi8> to vector<64x128xf32>
    %5 = arith.truncf %4 : vector<64x128xf32> to vector<64x128xbf16>
    %c128_i32 = arith.constant 128 : i32
    %6 = arith.muli %arg1, %c128_i32 : i32
    %7 = tpu.assume_multiple %6, 128 : i32
    %8 = arith.index_cast %7 : i32 to index
    %c0_2 = arith.constant 0 : index
    %9 = vector.load %arg3[%8, %c0_2] : memref<128x128xbf16, #tpu.memory_space<vmem>>, vector<128x128xbf16>
    %c0_3 = arith.constant 0 : index
    %c0_4 = arith.constant 0 : index
    %10 = vector.load %arg7[%c0_3, %c0_4] : memref<64x128xf32, #tpu.memory_space<vmem>>, vector<64x128xf32>
    %cst = arith.constant dense<0.000000e+00> : vector<64x128xf32>
    %11 = tpu.matmul %5, %9, %cst {dimension_numbers = #tpu.dot_dimension_numbers<[1], [0], [0], [1], [0, 0, 1, 1], [], []>} : vector<64x128xbf16>, vector<128x128xbf16>, vector<64x128xf32> -> vector<64x128xf32>
    %12 = arith.addf %10, %11 : vector<64x128xf32>
    %c0_5 = arith.constant 0 : index
    %c0_6 = arith.constant 0 : index
    %13 = vector.load %arg7[%c0_5, %c0_6] : memref<64x128xf32, #tpu.memory_space<vmem>>, vector<64x128xf32>
    tpu.vector_store %arg7[%c0_5, %c0_6], %12 {strides = array<i32>} : memref<64x128xf32, #tpu.memory_space<vmem>>, vector<64x128xf32>,
    %c0_i32_7 = arith.constant 0 : i32
    %14 = arith.cmpi eq, %arg1, %c0_i32_7 : i32
    %15 = arith.extui %14 : i1 to i32
    %c0_i32_8 = arith.constant 0 : i32
    %16 = arith.cmpi ne, %15, %c0_i32_8 : i32
    scf.if %16 {
      %c0_9 = arith.constant 0 : index
      %c0_10 = arith.constant 0 : index
      %17 = vector.load %arg7[%c0_9, %c0_10] : memref<64x128xf32, #tpu.memory_space<vmem>>, vector<64x128xf32>
      %c0_11 = arith.constant 0 : index
      %c0_12 = arith.constant 0 : index
      %18 = vector.load %arg4[%c0_11, %c0_12] : memref<64x1xf32, #tpu.memory_space<vmem>>, vector<64x1xf32>
      %19 = vector.broadcast %18 : vector<64x1xf32> to vector<64x128xf32>
      %20 = arith.mulf %17, %19 : vector<64x128xf32>
      %c0_13 = arith.constant 0 : index
      %c0_14 = arith.constant 0 : index
      %21 = vector.load %arg5[%c0_13, %c0_14] : memref<1x128xf32, #tpu.memory_space<vmem>>, vector<1x128xf32>
      %22 = vector.broadcast %21 : vector<1x128xf32> to vector<64x128xf32>
      %23 = arith.addf %20, %22 : vector<64x128xf32>
      %cst_15 = arith.constant 0.000000e+00 : f32
      %24 = vector.broadcast %cst_15 : f32 to vector<64x128xf32>
      %25 = arith.maximumf %23, %24 : vector<64x128xf32>
      %c0_16 = arith.constant 0 : index
      %c0_17 = arith.constant 0 : index
      %26 = vector.load %arg6[%c0_16, %c0_17] : memref<64x128xf32, #tpu.memory_space<vmem>>, vector<64x128xf32>
      tpu.vector_store %arg6[%c0_16, %c0_17], %25 {strides = array<i32>} : memref<64x128xf32, #tpu.memory_space<vmem>>, vector<64x128xf32>,
    } else {
    }
    return
  }
  func.func @transform_0(%arg0: i32, %arg1: i32) -> (i32, i32) {
    %c0_i32 = arith.constant 0 : i32
    return %arg0, %arg1 : i32, i32
  }
  func.func @transform_1(%arg0: i32, %arg1: i32) -> (i32, i32) {
    %c0_i32 = arith.constant 0 : i32
    %c0_i32_0 = arith.constant 0 : i32
    %c0_i32_1 = arith.constant 0 : i32
    return %c0_i32, %c0_i32_0 : i32, i32
  }
  func.func @transform_2(%arg0: i32, %arg1: i32) -> (i32, i32) {
    %c0_i32 = arith.constant 0 : i32
    %c0_i32_0 = arith.constant 0 : i32
    return %arg0, %c0_i32 : i32, i32
  }
  func.func @transform_3(%arg0: i32, %arg1: i32) -> (i32, i32) {
    %c0_i32 = arith.constant 0 : i32
    %c0_i32_0 = arith.constant 0 : i32
    %c0_i32_1 = arith.constant 0 : i32
    return %c0_i32, %c0_i32_0 : i32, i32
  }
  func.func @transform_4(%arg0: i32, %arg1: i32) -> (i32, i32) {
    %c0_i32 = arith.constant 0 : i32
    %c0_i32_0 = arith.constant 0 : i32
    return %arg0, %c0_i32 : i32, i32
  }
}

</mosaic_0001>

<llo_original>
// kernel: gcn_forward.3
$region0: #{gcn_forward.3}
  #allocation0 [shape = 'u32[]', space=smem, size = 0x4, offset = 0x4, fixed_abs, tag = 'smem constant byte address 0x4 - core index']
  #allocation1 [shape = 'u32[144,128]{1,0:T(1,128)}', space=vmem, size = 0x12000, scoped, tag = 'internal scratch']
  %s0 = inlined_call_operand.vmem [shape: f32[128,128], index: 0, kind: input, shape index: {}]
  %s1 = inlined_call_operand.vmem [shape: f32[128,128], index: 1, kind: input, shape index: {}]
  %s2 = inlined_call_operand.vmem [shape: f32[128,1], index: 2, kind: input, shape index: {}]
  %s3 = inlined_call_operand.vmem [shape: bf16[128,128], index: 3, kind: output, shape index: {}]
  %s4 = sld [smem:[#allocation0]]
  $region45: #{gcn_forward.3} parent=0
    _
  %s6 = ssub.s32 1, %s4
  %s7 = scalar_select 0, %s6, %s4
  loop: start=0, step=1, limit=4
  $region2: #{gcn_forward.3} parent=0 // loop_pre_header
    _
  $region3: #{gcn_forward.3} parent=0 // loop_header
    %s9 = sphi 0, %s13
    %p10 = scmp.ge.s32.totalorder %s9, 4
    %s19 = sphi 0, %s21
    %s22 = sphi 0, %s19
    %s23 = sphi 0, %s22
    %s39 = sphi 0, %s23
    %s43 = sphi 0, %s43
    %s45 = sphi 0, %s43
    %s46 = sphi 0, %s45
    %s60 = sphi 0, %s46
    %s66 = sphi 0, %s68
    %s69 = sphi 0, %s66
    %s70 = sphi 0, %s69
    %s86 = sphi 0, %s70
    %s92 = sphi 0, %s94
    %s95 = sphi 0, %s92
    %s96 = sphi 0, %s95
    %s112 = sphi 0, %s96
  $region4: #{gcn_forward.3} parent=0 // loop_header_branch
    %12 = sbr.rel (%p10) target = $region8
  $region5: #{gcn_forward.3} parent=0 // loop_body
    %s14 = ssub.s32 %s9, 1
    %s15 = ssub.s32 %s9, 2
    %s16 = sadd.s32 %s9, 1
    %s17 = ssub.s32 %s9, %s16
    %p18 = scmp.eq.s32.totalorder %s17, 0
    %s20 = sadd.s32 %s19, 1
    %s21 = scalar_select %p18, %s19, %s20
    %p24 = pneg %p18
    %p25 = scmp.eq.s32.totalorder %s9, 1
    %p26 = por %p24, %p25
    %p27 = scmp.ne.s32.totalorder %s19, %s22
    %p28 = scmp.eq.s32.totalorder %s9, 0
    %p29 = por %p27, %p28
    %p30 = scmp.ne.s32.totalorder %s19, %s22
    %p31 = scmp.eq.s32.totalorder %s14, 1
    %p32 = por %p30, %p31
    %p33 = scmp.ne.s32.totalorder %s22, %s23
    %p34 = scmp.eq.s32.totalorder %s14, 0
    %p35 = por %p33, %p34
    %p36 = scmp.ne.s32.totalorder %s22, %s23
    %p37 = scmp.eq.s32.totalorder %s15, 1
    %p38 = por %p36, %p37
    %p40 = scmp.ne.s32.totalorder %s23, %s39
    %p41 = scmp.eq.s32.totalorder %s15, 0
    %p42 = por %p40, %p41
    %s44 = sadd.s32 %s43, 1
    %p47 = scmp.eq.s32.totalorder %s9, 1
    %p48 = scmp.ne.s32.totalorder %s43, %s45
    %p49 = scmp.eq.s32.totalorder %s9, 0
    %p50 = por %p48, %p49
    %p51 = scmp.ne.s32.totalorder %s43, %s45
    %p52 = scmp.eq.s32.totalorder %s14, 1
    %p53 = por %p51, %p52
    %p54 = scmp.ne.s32.totalorder %s45, %s46
    %p55 = scmp.eq.s32.totalorder %s14, 0
    %p56 = por %p54, %p55
    %p57 = scmp.ne.s32.totalorder %s45, %s46
    %p58 = scmp.eq.s32.totalorder %s15, 1
    %p59 = por %p57, %p58
    %p61 = scmp.ne.s32.totalorder %s46, %s60
    %p62 = scmp.eq.s32.totalorder %s15, 0
    %p63 = por %p61, %p62
    %s64 = ssub.s32 %s9, %s16
    %p65 = scmp.eq.s32.totalorder %s64, 0
    %s67 = sadd.s32 %s66, 1
    %s68 = scalar_select %p65, %s66, %s67
    %p71 = pneg %p65
    %p72 = scmp.eq.s32.totalorder %s9, 1
    %p73 = por %p71, %p72
    %p74 = scmp.ne.s32.totalorder %s66, %s69
    %p75 = scmp.eq.s32.totalorder %s9, 0
    %p76 = por %p74, %p75
    %p77 = scmp.ne.s32.totalorder %s66, %s69
    %p78 = scmp.eq.s32.totalorder %s14, 1
    %p79 = por %p77, %p78
    %p80 = scmp.ne.s32.totalorder %s69, %s70
    %p81 = scmp.eq.s32.totalorder %s14, 0
    %p82 = por %p80, %p81
    %p83 = scmp.ne.s32.totalorder %s69, %s70
    %p84 = scmp.eq.s32.totalorder %s15, 1
    %p85 = por %p83, %p84
    %p87 = scmp.ne.s32.totalorder %s70, %s86
    %p88 = scmp.eq.s32.totalorder %s15, 0
    %p89 = por %p87, %p88
    %s90 = ssub.s32 %s9, %s16
    %p91 = scmp.eq.s32.totalorder %s90, 0
    %s93 = sadd.s32 %s92, 1
    %s94 = scalar_select %p91, %s92, %s93
    %p97 = pneg %p91
    %p98 = scmp.eq.s32.totalorder %s9, 1
    %p99 = por %p97, %p98
    %p100 = scmp.ne.s32.totalorder %s92, %s95
    %p101 = scmp.eq.s32.totalorder %s9, 0
    %p102 = por %p100, %p101
    %p103 = scmp.ne.s32.totalorder %s92, %s95
    %p104 = scmp.eq.s32.totalorder %s14, 1
    %p105 = por %p103, %p104
    %p106 = scmp.ne.s32.totalorder %s95, %s96
    %p107 = scmp.eq.s32.totalorder %s14, 0
    %p108 = por %p106, %p107
    %p109 = scmp.ne.s32.totalorder %s95, %s96
    %p110 = scmp.eq.s32.totalorder %s15, 1
    %p111 = por %p109, %p110
    %p113 = scmp.ne.s32.totalorder %s96, %s112
    %p114 = scmp.eq.s32.totalorder %s15, 0
    %p115 = por %p113, %p114
    %p116 = scmp.le.s32.totalorder 1, %s9
    %p117 = scmp.lt.s32.totalorder %s9, 3
    %p118 = pnand %p116, %p117
    %p119 = pneg %p118
    // Predicated region
    $region9: #{gcn_forward.3} parent=5 // pred_check
      _
    $region10: #{gcn_forward.3} parent=5 // pred_check_branch
      %121 = sbr.rel (%p118) target = $region12
    $region11: #{gcn_forward.3} parent=5 // pred_region
      %s122 = ssub.s32 %s9, 1
      // Predicated region
      $region13: #{gcn_forward.3} parent=11 // pred_check
        %p123 = pneg %p56
      $region14: #{gcn_forward.3} parent=11 // pred_check_branch
        %125 = sbr.rel (%p123) target = $region16
      $region15: #{gcn_forward.3} parent=11 // pred_region
        _
      $region16: #{gcn_forward.3} parent=11 // pred_fallthru
        _
    $region12: #{gcn_forward.3} parent=5 // pred_fallthru
      _
    %p126 = scmp.lt.s32.totalorder %s9, 2
    // Predicated region
    $region17: #{gcn_forward.3} parent=5 // pred_check
      %p127 = pneg %p126
    $region18: #{gcn_forward.3} parent=5 // pred_check_branch
      %129 = sbr.rel (%p127) target = $region20
    $region19: #{gcn_forward.3} parent=5 // pred_region
      // Predicated region
      $region21: #{gcn_forward.3} parent=19 // pred_check
        %p130 = pneg %p29
      $region22: #{gcn_forward.3} parent=19 // pred_check_branch
        %132 = sbr.rel (%p130) target = $region24
      $region23: #{gcn_forward.3} parent=19 // pred_region
        %s133 = smul.u32 8, %s9
        %p134 = scmp.lt.s32.totalorder %s133, 15
        %s135 = scalar_select %p134, %s133, 15
        %s136 = smul.addr %s135, 8
        %s137 = scalar_lea.vmem %s0, %s136
        %s138 = smul.u32 8, %s9
      $region24: #{gcn_forward.3} parent=19 // pred_fallthru
        _
      // Predicated region
      $region25: #{gcn_forward.3} parent=19 // pred_check
        %p139 = pneg %p76
      $region26: #{gcn_forward.3} parent=19 // pred_check_branch
        %141 = sbr.rel (%p139) target = $region28
      $region27: #{gcn_forward.3} parent=19 // pred_region
        %s142 = smul.u32 8, %s9
        %p143 = scmp.lt.s32.totalorder %s142, 15
        %s144 = scalar_select %p143, %s142, 15
        %s145 = smul.addr %s144, 8
        %s146 = scalar_lea.vmem %s2, %s145
        %s147 = smul.u32 8, %s9
      $region28: #{gcn_forward.3} parent=19 // pred_fallthru
        _
    $region20: #{gcn_forward.3} parent=5 // pred_fallthru
      _
    %p148 = scmp.le.s32.totalorder 1, %s9
    %p149 = scmp.lt.s32.totalorder %s9, 3
    %p150 = pnand %p148, %p149
    %p151 = pneg %p150
    // Predicated region
    $region29: #{gcn_forward.3} parent=5 // pred_check
      _
    $region30: #{gcn_forward.3} parent=5 // pred_check_branch
      %153 = sbr.rel (%p150) target = $region32
    $region31: #{gcn_forward.3} parent=5 // pred_region
      %s154 = ssub.s32 %s9, 1
      %s155 = smul.u32 8, %s14
      %p156 = scmp.lt.s32.totalorder %s155, 15
      %s157 = scalar_select %p156, %s155, 15
      %s158 = smul.addr %s157, 8
      %s159 = scalar_lea.vmem %s0, %s158
      %p160 = pneg %p35
      %p161 = pneg %p32
      %p162 = pneg %p56
      %p163 = pneg %p53
      %s164 = smul.u32 8, %s14
      %p165 = scmp.lt.s32.totalorder %s164, 15
      %s166 = scalar_select %p165, %s164, 15
      %s167 = smul.addr %s166, 8
      %s168 = scalar_lea.vmem %s2, %s167
      %p169 = pneg %p82
      %p170 = pneg %p79
      %p171 = pneg %p108
      %p172 = pneg %p105
      %s173 = smul.u32 8, %s14
      %p174 = scmp.lt.s32.totalorder %s173, 15
      %s175 = scalar_select %p174, %s173, 15
      %s176 = smul.addr %s175, 4
      %s177 = scalar_lea.vmem %s3, %s176
      %s178 = smul.u32 8, %s14
      %p179 = scmp.lt.s32.totalorder %s178, 15
      %s180 = scalar_select %p179, %s178, 15
      %s181 = smul.addr %s180, 8
      %s182 = scalar_lea.vmem %s0, %s181
      %s183 = smul.u32 8, %s14
      %s184 = smul.u32 8, %s14
      %p185 = scmp.lt.s32.totalorder %s184, 15
      %s186 = scalar_select %p185, %s184, 15
      %s187 = smul.addr %s186, 8
      %s188 = scalar_lea.vmem %s2, %s187
      %s189 = smul.u32 8, %s14
      %s190 = smul.u32 8, %s14
      %p191 = scmp.lt.s32.totalorder %s190, 15
      %s192 = scalar_select %p191, %s190, 15
      %s193 = smul.addr %s192, 4
      %s194 = scalar_lea.vmem %s3, %s193
      %s195 = smul.u32 8, %s14
      %v196 = vld [vmem:[%s182] sm:$0xff]
      %v197 = vld [vmem:[%s182 + $0x8] sm:$0xff]
      %v198 = vld [vmem:[%s182 + $0x10] sm:$0xff]
      %v199 = vld [vmem:[%s182 + $0x18] sm:$0xff]
      %v200 = vld [vmem:[%s182 + $0x20] sm:$0xff]
      %v201 = vld [vmem:[%s182 + $0x28] sm:$0xff]
      %v202 = vld [vmem:[%s182 + $0x30] sm:$0xff]
      %v203 = vld [vmem:[%s182 + $0x38] sm:$0xff]
      %v204 = vld [vmem:[%s1] sm:$0xff]
      %v205 = vld [vmem:[%s1 + $0x8] sm:$0xff]
      %v206 = vld [vmem:[%s1 + $0x10] sm:$0xff]
      %v207 = vld [vmem:[%s1 + $0x18] sm:$0xff]
      %v208 = vld [vmem:[%s1 + $0x20] sm:$0xff]
      %v209 = vld [vmem:[%s1 + $0x28] sm:$0xff]
      %v210 = vld [vmem:[%s1 + $0x30] sm:$0xff]
      %v211 = vld [vmem:[%s1 + $0x38] sm:$0xff]
      %v212 = vld [vmem:[%s1 + $0x40] sm:$0xff]
      %v213 = vld [vmem:[%s1 + $0x48] sm:$0xff]
      %v214 = vld [vmem:[%s1 + $0x50] sm:$0xff]
      %v215 = vld [vmem:[%s1 + $0x58] sm:$0xff]
      %v216 = vld [vmem:[%s1 + $0x60] sm:$0xff]
      %v217 = vld [vmem:[%s1 + $0x68] sm:$0xff]
      %v218 = vld [vmem:[%s1 + $0x70] sm:$0xff]
      %v219 = vld [vmem:[%s1 + $0x78] sm:$0xff]
      %220 = vmatprep.subr.mxu0 0.0
      %221 = vmatpush1.msra.mxu0 %v219
      %222 = vmatprep.subr.mxu0 0.0
      %223 = vmatpush1.msra.mxu0 %v218
      %224 = vmatprep.subr.mxu0 0.0
      %225 = vmatpush1.msra.mxu0 %v217
      %226 = vmatprep.subr.mxu0 0.0
      %227 = vmatpush1.msra.mxu0 %v216
      %228 = vmatprep.subr.mxu0 0.0
      %229 = vmatpush1.msra.mxu0 %v215
      %230 = vmatprep.subr.mxu0 0.0
      %231 = vmatpush1.msra.mxu0 %v214
      %232 = vmatprep.subr.mxu0 0.0
      %233 = vmatpush1.msra.mxu0 %v213
      %234 = vmatprep.subr.mxu0 0.0
      %235 = vmatpush1.msra.mxu0 %v212
      %236 = vmatprep.subr.mxu0 0.0
      %237 = vmatpush1.msra.mxu0 %v211
      %238 = vmatprep.subr.mxu0 0.0
      %239 = vmatpush1.msra.mxu0 %v210
      %240 = vmatprep.subr.mxu0 0.0
      %241 = vmatpush1.msra.mxu0 %v209
      %242 = vmatprep.subr.mxu0 0.0
      %243 = vmatpush1.msra.mxu0 %v208
      %244 = vmatprep.subr.mxu0 0.0
      %245 = vmatpush1.msra.mxu0 %v207
      %246 = vmatprep.subr.mxu0 0.0
      %247 = vmatpush1.msra.mxu0 %v206
      %248 = vmatprep.subr.mxu0 0.0
      %249 = vmatpush1.msra.mxu0 %v205
      %250 = vmatprep.subr.mxu0 0.0
      %251 = vmatpush1.msra.mxu0 %v204
      %252 = vmatprep.subr.mxu0 0.0
      %253 = vmatpush2.msra.mxu0 0.0
      %254 = vmatprep.subr.mxu0 0.0
      %255 = vmatpush2.msra.mxu0 0.0
      %256 = vmatprep.subr.mxu0 0.0
      %257 = vmatpush2.msra.mxu0 0.0
      %258 = vmatprep.subr.mxu0 0.0
      %259 = vmatpush2.msra.mxu0 0.0
      %260 = vmatprep.subr.mxu0 0.0
      %261 = vmatpush2.msra.mxu0 0.0
      %262 = vmatprep.subr.mxu0 0.0
      %263 = vmatpush2.msra.mxu0 0.0
      %264 = vmatprep.subr.mxu0 0.0
      %265 = vmatpush2.msra.mxu0 0.0
      %266 = vmatprep.subr.mxu0 0.0
      %267 = vmatpush2.msra.mxu0 0.0
      %268 = vmatprep.subr.mxu0 0.0
      %269 = vmatpush2.msra.mxu0 0.0
      %270 = vmatprep.subr.mxu0 0.0
      %271 = vmatpush2.msra.mxu0 0.0
      %272 = vmatprep.subr.mxu0 0.0
      %273 = vmatpush2.msra.mxu0 0.0
      %274 = vmatprep.subr.mxu0 0.0
      %275 = vmatpush2.msra.mxu0 0.0
      %276 = vmatprep.subr.mxu0 0.0
      %277 = vmatpush2.msra.mxu0 0.0
      %278 = vmatprep.subr.mxu0 0.0
      %279 = vmatpush2.msra.mxu0 0.0
      %280 = vmatprep.subr.mxu0 0.0
      %281 = vmatpush2.msra.mxu0 0.0
      %282 = vmatprep.subr.mxu0 0.0
      %283 = vmatpush2.msra.mxu0 0.0
      %284 = vmatprep.mubr.f32.mxu0 0.0
      %285 = vmatmul.mubr.f32.gmra.mxu0 %v196
      %v286 = vpop.f32.mrf.mxu0
      %v287 = vadd.f32 0.0, %v286
      %v288 = vpop.f32.mrf.mxu0
      %289 = vmatprep.mubr.f32.mxu0 0.0
      %290 = vmatmul.mubr.f32.gmra.mxu0 %v197
      %v291 = vpop.f32.mrf.mxu0
      %v292 = vadd.f32 0.0, %v291
      %v293 = vpop.f32.mrf.mxu0
      %294 = vmatprep.mubr.f32.mxu0 0.0
      %295 = vmatmul.mubr.f32.gmra.mxu0 %v198
      %v296 = vpop.f32.mrf.mxu0
      %v297 = vadd.f32 0.0, %v296
      %v298 = vpop.f32.mrf.mxu0
      %299 = vmatprep.mubr.f32.mxu0 0.0
      %300 = vmatmul.mubr.f32.gmra.mxu0 %v199
      %v301 = vpop.f32.mrf.mxu0
      %v302 = vadd.f32 0.0, %v301
      %v303 = vpop.f32.mrf.mxu0
      %304 = vmatprep.mubr.f32.mxu0 0.0
      %305 = vmatmul.mubr.f32.gmra.mxu0 %v200
      %v306 = vpop.f32.mrf.mxu0
      %v307 = vadd.f32 0.0, %v306
      %v308 = vpop.f32.mrf.mxu0
      %309 = vmatprep.mubr.f32.mxu0 0.0
      %310 = vmatmul.mubr.f32.gmra.mxu0 %v201
      %v311 = vpop.f32.mrf.mxu0
      %v312 = vadd.f32 0.0, %v311
      %v313 = vpop.f32.mrf.mxu0
      %314 = vmatprep.mubr.f32.mxu0 0.0
      %315 = vmatmul.mubr.f32.gmra.mxu0 %v202
      %v316 = vpop.f32.mrf.mxu0
      %v317 = vadd.f32 0.0, %v316
      %v318 = vpop.f32.mrf.mxu0
      %319 = vmatprep.mubr.f32.mxu0 0.0
      %320 = vmatmul.mubr.f32.gmra.mxu0 %v203
      %v321 = vpop.f32.mrf.mxu0
      %v322 = vadd.f32 0.0, %v321
      %v323 = vpop.f32.mrf.mxu0
      %324 = vdwg.mxu0
      %v325 = vld [vmem:[%s188] sm:$0xff]
      %v326 = vld [vmem:[%s188 + $0x8] sm:$0xff]
      %v327 = vld [vmem:[%s188 + $0x10] sm:$0xff]
      %v328 = vld [vmem:[%s188 + $0x18] sm:$0xff]
      %v329 = vld [vmem:[%s188 + $0x20] sm:$0xff]
      %v330 = vld [vmem:[%s188 + $0x28] sm:$0xff]
      %v331 = vld [vmem:[%s188 + $0x30] sm:$0xff]
      %v332 = vld [vmem:[%s188 + $0x38] sm:$0xff]
      %334 = vset.pattern.permute.xlu0 0
      %335 = vperm.xlu0 %334, %v325
      %v336 = vpop.permute.xlu0 %335
      %339 = vset.pattern.permute.xlu0 0
      %340 = vperm.xlu0 %339, %v326
      %v341 = vpop.permute.xlu0 %340
      %344 = vset.pattern.permute.xlu0 0
      %345 = vperm.xlu0 %344, %v327
      %v346 = vpop.permute.xlu0 %345
      %349 = vset.pattern.permute.xlu0 0
      %350 = vperm.xlu0 %349, %v328
      %v351 = vpop.permute.xlu0 %350
      %354 = vset.pattern.permute.xlu0 0
      %355 = vperm.xlu0 %354, %v329
      %v356 = vpop.permute.xlu0 %355
      %359 = vset.pattern.permute.xlu0 0
      %360 = vperm.xlu0 %359, %v330
      %v361 = vpop.permute.xlu0 %360
      %364 = vset.pattern.permute.xlu0 0
      %365 = vperm.xlu0 %364, %v331
      %v366 = vpop.permute.xlu0 %365
      %369 = vset.pattern.permute.xlu0 0
      %370 = vperm.xlu0 %369, %v332
      %v371 = vpop.permute.xlu0 %370
      %v373 = vmul.f32 %v287, %v336
      %v374 = vmul.f32 %v292, %v341
      %v375 = vmul.f32 %v297, %v346
      %v376 = vmul.f32 %v302, %v351
      %v377 = vmul.f32 %v307, %v356
      %v378 = vmul.f32 %v312, %v361
      %v379 = vmul.f32 %v317, %v366
      %v380 = vmul.f32 %v322, %v371
      %v381 = vpack.c.bf16 %v374, %v373
      %v382 = vpack.c.bf16 %v376, %v375
      %v383 = vpack.c.bf16 %v378, %v377
      %v384 = vpack.c.bf16 %v380, %v379
      %v389 = vunpack.c.l.b16 %v381
      %v390 = vunpack.c.h.b16 %v381
      %v391 = vunpack.c.l.b16 %v382
      %v392 = vunpack.c.h.b16 %v382
      %v393 = vunpack.c.l.b16 %v383
      %v394 = vunpack.c.h.b16 %v383
      %v395 = vunpack.c.l.b16 %v384
      %v396 = vunpack.c.h.b16 %v384
      %v397 = vpack.c.b16 %v389, %v389
      %v398 = vpack.c.b16 %v390, %v390
      %v399 = vpack.c.b16 %v391, %v391
      %v400 = vpack.c.b16 %v392, %v392
      %v401 = vpack.c.b16 %v393, %v393
      %v402 = vpack.c.b16 %v394, %v394
      %v403 = vpack.c.b16 %v395, %v395
      %v404 = vpack.c.b16 %v396, %v396
      %413 = vst [vmem:[%s194] sm:$0xf] %v397
      %414 = vst [vmem:[%s194 + $0x4] sm:$0xf] %v398
      %415 = vst [vmem:[%s194 + $0x8] sm:$0xf] %v399
      %416 = vst [vmem:[%s194 + $0xc] sm:$0xf] %v400
      %417 = vst [vmem:[%s194 + $0x10] sm:$0xf] %v401
      %418 = vst [vmem:[%s194 + $0x14] sm:$0xf] %v402
      %419 = vst [vmem:[%s194 + $0x18] sm:$0xf] %v403
      %420 = vst [vmem:[%s194 + $0x1c] sm:$0xf] %v404
      %s421 = smul.u32 8, %s14
      %p422 = scmp.lt.s32.totalorder %s421, 15
      %s423 = scalar_select %p422, %s421, 15
      %s424 = smul.addr %s423, 4
      %s425 = scalar_lea.vmem %s3, %s424
      // Predicated region
      $region33: #{gcn_forward.3} parent=31 // pred_check
        %p426 = pneg %p105
      $region34: #{gcn_forward.3} parent=31 // pred_check_branch
        %428 = sbr.rel (%p426) target = $region36
      $region35: #{gcn_forward.3} parent=31 // pred_region
        %s429 = smul.u32 8, %s14
      $region36: #{gcn_forward.3} parent=31 // pred_fallthru
        _
    $region32: #{gcn_forward.3} parent=5 // pred_fallthru
      _
    %p430 = scmp.le.s32.totalorder 2, %s9
    // Predicated region
    $region37: #{gcn_forward.3} parent=5 // pred_check
      %p431 = pneg %p430
    $region38: #{gcn_forward.3} parent=5 // pred_check_branch
      %433 = sbr.rel (%p431) target = $region40
    $region39: #{gcn_forward.3} parent=5 // pred_region
      %s434 = ssub.s32 %s9, 2
      // Predicated region
      $region41: #{gcn_forward.3} parent=39 // pred_check
        %p435 = pneg %p111
      $region42: #{gcn_forward.3} parent=39 // pred_check_branch
        %437 = sbr.rel (%p435) target = $region44
      $region43: #{gcn_forward.3} parent=39 // pred_region
        %s438 = smul.u32 8, %s15
        %p439 = scmp.lt.s32.totalorder %s438, 15
        %s440 = scalar_select %p439, %s438, 15
        %s441 = smul.addr %s440, 4
        %s442 = scalar_lea.vmem %s3, %s441
      $region44: #{gcn_forward.3} parent=39 // pred_fallthru
        _
    $region40: #{gcn_forward.3} parent=5 // pred_fallthru
      _
  $region6: #{gcn_forward.3} parent=0 // loop_footer
    %s13 = sadd.s32 1, %s9
  $region7: #{gcn_forward.3} parent=0 // loop_footer_branch
    %8 = sbr.rel target = $region3
  $region8: #{gcn_forward.3} parent=0 // loop_exit
    _

// kernel: gcn_forward.5
$region0: #{gcn_forward.5}
  #allocation0 [shape = 'u32[]', space=smem, size = 0x4, offset = 0x4, fixed_abs, tag = 'smem constant byte address 0x4 - core index']
  #allocation1 [shape = 'u32[144,128]{1,0:T(1,128)}', space=vmem, size = 0x12000, scoped, tag = 'internal scratch']
  #allocation2 [shape = 'f32[64,128]{1,0:T(8,128)}', space=vmem, size = 0x8000, scoped, tag = 'scratch operand']
  %s0 = inlined_call_operand.vmem [shape: s8[128,128], index: 0, kind: input, shape index: {}]
  %s1 = inlined_call_operand.vmem [shape: bf16[128,128], index: 1, kind: input, shape index: {}]
  %s2 = inlined_call_operand.vmem [shape: f32[128,1], index: 2, kind: input, shape index: {}]
  %s3 = inlined_call_operand.vmem [shape: f32[1,128], index: 3, kind: input, shape index: {}]
  %s4 = inlined_call_operand.vmem [shape: f32[128,128], index: 4, kind: output, shape index: {}]
  %s5 = sld [smem:[#allocation0]]
  $region57: #{gcn_forward.5} parent=0
    _
  %s7 = ssub.s32 1, %s5
  %s8 = scalar_select 0, %s7, %s5
  loop: start=0, step=1, limit=4
  $region2: #{gcn_forward.5} parent=0 // loop_pre_header
    _
  $region3: #{gcn_forward.5} parent=0 // loop_header
    %s10 = sphi 0, %s14
    %p11 = scmp.ge.s32.totalorder %s10, 4
    %s17 = sphi 0, %s29
    %s18 = sphi 0, %s25
    %s19 = sphi 0, %s17
    %s20 = sphi 0, %s18
    %s21 = sphi 0, %s19
    %s22 = sphi 0, %s20
    %s34 = sphi 0, %s36
    %s37 = sphi 0, %s34
    %s38 = sphi 0, %s37
    %s54 = sphi 0, %s38
    %s58 = sphi 0, %s58
    %s60 = sphi 0, %s58
    %s61 = sphi 0, %s60
    %s75 = sphi 0, %s61
    %s81 = sphi 0, %s83
    %s84 = sphi 0, %s81
    %s85 = sphi 0, %s84
    %s101 = sphi 0, %s85
    %s105 = sphi 0, %s105
    %s107 = sphi 0, %s105
    %s108 = sphi 0, %s107
    %s122 = sphi 0, %s108
    %s128 = sphi 0, %s130
    %s131 = sphi 0, %s128
    %s132 = sphi 0, %s131
    %s148 = sphi 0, %s132
  $region4: #{gcn_forward.5} parent=0 // loop_header_branch
    %13 = sbr.rel (%p11) target = $region8
  $region5: #{gcn_forward.5} parent=0 // loop_body
    %s15 = ssub.s32 %s10, 1
    %s16 = ssub.s32 %s10, 2
    %s23 = sadd.s32 1, %s18
    %p24 = scmp.ge.s32.totalorder %s23, 1
    %s25 = scalar_select %p24, 0, %s23
    %s26 = sadd.s32 1, %s17
    %s27 = scalar_select %p24, %s26, %s17
    %p28 = scmp.ge.s32.totalorder %s27, 2
    %s29 = scalar_select %p28, 0, %s27
    %s30 = ssub.s32 %s17, %s29
    %s31 = ssub.s32 %s18, %s25
    %s32 = sor.u32 %s30, %s31
    %p33 = scmp.eq.s32.totalorder %s32, 0
    %s35 = sadd.s32 %s34, 1
    %s36 = scalar_select %p33, %s34, %s35
    %p39 = pneg %p33
    %p40 = scmp.eq.s32.totalorder %s10, 1
    %p41 = por %p39, %p40
    %p42 = scmp.ne.s32.totalorder %s34, %s37
    %p43 = scmp.eq.s32.totalorder %s10, 0
    %p44 = por %p42, %p43
    %p45 = scmp.ne.s32.totalorder %s34, %s37
    %p46 = scmp.eq.s32.totalorder %s15, 1
    %p47 = por %p45, %p46
    %p48 = scmp.ne.s32.totalorder %s37, %s38
    %p49 = scmp.eq.s32.totalorder %s15, 0
    %p50 = por %p48, %p49
    %p51 = scmp.ne.s32.totalorder %s37, %s38
    %p52 = scmp.eq.s32.totalorder %s16, 1
    %p53 = por %p51, %p52
    %p55 = scmp.ne.s32.totalorder %s38, %s54
    %p56 = scmp.eq.s32.totalorder %s16, 0
    %p57 = por %p55, %p56
    %s59 = sadd.s32 %s58, 1
    %p62 = scmp.eq.s32.totalorder %s10, 1
    %p63 = scmp.ne.s32.totalorder %s58, %s60
    %p64 = scmp.eq.s32.totalorder %s10, 0
    %p65 = por %p63, %p64
    %p66 = scmp.ne.s32.totalorder %s58, %s60
    %p67 = scmp.eq.s32.totalorder %s15, 1
    %p68 = por %p66, %p67
    %p69 = scmp.ne.s32.totalorder %s60, %s61
    %p70 = scmp.eq.s32.totalorder %s15, 0
    %p71 = por %p69, %p70
    %p72 = scmp.ne.s32.totalorder %s60, %s61
    %p73 = scmp.eq.s32.totalorder %s16, 1
    %p74 = por %p72, %p73
    %p76 = scmp.ne.s32.totalorder %s61, %s75
    %p77 = scmp.eq.s32.totalorder %s16, 0
    %p78 = por %p76, %p77
    %s79 = ssub.s32 %s17, %s29
    %p80 = scmp.eq.s32.totalorder %s79, 0
    %s82 = sadd.s32 %s81, 1
    %s83 = scalar_select %p80, %s81, %s82
    %p86 = pneg %p80
    %p87 = scmp.eq.s32.totalorder %s10, 1
    %p88 = por %p86, %p87
    %p89 = scmp.ne.s32.totalorder %s81, %s84
    %p90 = scmp.eq.s32.totalorder %s10, 0
    %p91 = por %p89, %p90
    %p92 = scmp.ne.s32.totalorder %s81, %s84
    %p93 = scmp.eq.s32.totalorder %s15, 1
    %p94 = por %p92, %p93
    %p95 = scmp.ne.s32.totalorder %s84, %s85
    %p96 = scmp.eq.s32.totalorder %s15, 0
    %p97 = por %p95, %p96
    %p98 = scmp.ne.s32.totalorder %s84, %s85
    %p99 = scmp.eq.s32.totalorder %s16, 1
    %p100 = por %p98, %p99
    %p102 = scmp.ne.s32.totalorder %s85, %s101
    %p103 = scmp.eq.s32.totalorder %s16, 0
    %p104 = por %p102, %p103
    %s106 = sadd.s32 %s105, 1
    %p109 = scmp.eq.s32.totalorder %s10, 1
    %p110 = scmp.ne.s32.totalorder %s105, %s107
    %p111 = scmp.eq.s32.totalorder %s10, 0
    %p112 = por %p110, %p111
    %p113 = scmp.ne.s32.totalorder %s105, %s107
    %p114 = scmp.eq.s32.totalorder %s15, 1
    %p115 = por %p113, %p114
    %p116 = scmp.ne.s32.totalorder %s107, %s108
    %p117 = scmp.eq.s32.totalorder %s15, 0
    %p118 = por %p116, %p117
    %p119 = scmp.ne.s32.totalorder %s107, %s108
    %p120 = scmp.eq.s32.totalorder %s16, 1
    %p121 = por %p119, %p120
    %p123 = scmp.ne.s32.totalorder %s108, %s122
    %p124 = scmp.eq.s32.totalorder %s16, 0
    %p125 = por %p123, %p124
    %s126 = ssub.s32 %s17, %s29
    %p127 = scmp.eq.s32.totalorder %s126, 0
    %s129 = sadd.s32 %s128, 1
    %s130 = scalar_select %p127, %s128, %s129
    %p133 = pneg %p127
    %p134 = scmp.eq.s32.totalorder %s10, 1
    %p135 = por %p133, %p134
    %p136 = scmp.ne.s32.totalorder %s128, %s131
    %p137 = scmp.eq.s32.totalorder %s10, 0
    %p138 = por %p136, %p137
    %p139 = scmp.ne.s32.totalorder %s128, %s131
    %p140 = scmp.eq.s32.totalorder %s15, 1
    %p141 = por %p139, %p140
    %p142 = scmp.ne.s32.totalorder %s131, %s132
    %p143 = scmp.eq.s32.totalorder %s15, 0
    %p144 = por %p142, %p143
    %p145 = scmp.ne.s32.totalorder %s131, %s132
    %p146 = scmp.eq.s32.totalorder %s16, 1
    %p147 = por %p145, %p146
    %p149 = scmp.ne.s32.totalorder %s132, %s148
    %p150 = scmp.eq.s32.totalorder %s16, 0
    %p151 = por %p149, %p150
    %p152 = scmp.le.s32.totalorder 1, %s10
    %p153 = scmp.lt.s32.totalorder %s10, 3
    %p154 = pnand %p152, %p153
    %p155 = pneg %p154
    // Predicated region
    $region9: #{gcn_forward.5} parent=5 // pred_check
      _
    $region10: #{gcn_forward.5} parent=5 // pred_check_branch
      %157 = sbr.rel (%p154) target = $region12
    $region11: #{gcn_forward.5} parent=5 // pred_region
      %s158 = ssub.s32 %s10, 1
      // Predicated region
      $region13: #{gcn_forward.5} parent=11 // pred_check
        %p159 = pneg %p71
      $region14: #{gcn_forward.5} parent=11 // pred_check_branch
        %161 = sbr.rel (%p159) target = $region16
      $region15: #{gcn_forward.5} parent=11 // pred_region
        _
      $region16: #{gcn_forward.5} parent=11 // pred_fallthru
        _
      // Predicated region
      $region17: #{gcn_forward.5} parent=11 // pred_check
        %p162 = pneg %p118
      $region18: #{gcn_forward.5} parent=11 // pred_check_branch
        %164 = sbr.rel (%p162) target = $region20
      $region19: #{gcn_forward.5} parent=11 // pred_region
        _
      $region20: #{gcn_forward.5} parent=11 // pred_fallthru
        _
    $region12: #{gcn_forward.5} parent=5 // pred_fallthru
      _
    %p165 = scmp.lt.s32.totalorder %s10, 2
    // Predicated region
    $region21: #{gcn_forward.5} parent=5 // pred_check
      %p166 = pneg %p165
    $region22: #{gcn_forward.5} parent=5 // pred_check_branch
      %168 = sbr.rel (%p166) target = $region24
    $region23: #{gcn_forward.5} parent=5 // pred_region
      // Predicated region
      $region25: #{gcn_forward.5} parent=23 // pred_check
        %p169 = pneg %p44
      $region26: #{gcn_forward.5} parent=23 // pred_check_branch
        %171 = sbr.rel (%p169) target = $region28
      $region27: #{gcn_forward.5} parent=23 // pred_region
        %s172 = smul.u32 2, %s17
        %p173 = scmp.lt.s32.totalorder %s172, 3
        %s174 = scalar_select %p173, %s172, 3
        %p175 = scmp.lt.s32.totalorder %s18, 0
        %s176 = scalar_select %p175, %s18, 0
        %s177 = sadd.s32 %s176, %s174
        %s178 = smul.addr %s177, 8
        %s179 = scalar_lea.vmem %s0, %s178
        %s180 = smul.u32 2, %s17
      $region28: #{gcn_forward.5} parent=23 // pred_fallthru
        _
      // Predicated region
      $region29: #{gcn_forward.5} parent=23 // pred_check
        %p181 = pneg %p91
      $region30: #{gcn_forward.5} parent=23 // pred_check_branch
        %183 = sbr.rel (%p181) target = $region32
      $region31: #{gcn_forward.5} parent=23 // pred_region
        %s184 = smul.u32 8, %s17
        %p185 = scmp.lt.s32.totalorder %s184, 15
        %s186 = scalar_select %p185, %s184, 15
        %s187 = smul.addr %s186, 8
        %s188 = scalar_lea.vmem %s2, %s187
        %s189 = smul.u32 8, %s17
      $region32: #{gcn_forward.5} parent=23 // pred_fallthru
        _
    $region24: #{gcn_forward.5} parent=5 // pred_fallthru
      _
    %p190 = scmp.le.s32.totalorder 1, %s10
    %p191 = scmp.lt.s32.totalorder %s10, 3
    %p192 = pnand %p190, %p191
    %p193 = pneg %p192
    // Predicated region
    $region33: #{gcn_forward.5} parent=5 // pred_check
      _
    $region34: #{gcn_forward.5} parent=5 // pred_check_branch
      %195 = sbr.rel (%p192) target = $region36
    $region35: #{gcn_forward.5} parent=5 // pred_region
      %s196 = ssub.s32 %s10, 1
      %s197 = smul.u32 2, %s19
      %p198 = scmp.lt.s32.totalorder %s197, 3
      %s199 = scalar_select %p198, %s197, 3
      %p200 = scmp.lt.s32.totalorder %s20, 0
      %s201 = scalar_select %p200, %s20, 0
      %s202 = sadd.s32 %s201, %s199
      %s203 = smul.addr %s202, 8
      %s204 = scalar_lea.vmem %s0, %s203
      %p205 = pneg %p50
      %p206 = pneg %p47
      %p207 = pneg %p71
      %p208 = pneg %p68
      %s209 = smul.u32 8, %s19
      %p210 = scmp.lt.s32.totalorder %s209, 15
      %s211 = scalar_select %p210, %s209, 15
      %s212 = smul.addr %s211, 8
      %s213 = scalar_lea.vmem %s2, %s212
      %p214 = pneg %p97
      %p215 = pneg %p94
      %p216 = pneg %p118
      %p217 = pneg %p115
      %p218 = pneg %p144
      %p219 = pneg %p141
      %s220 = smul.u32 8, %s19
      %p221 = scmp.lt.s32.totalorder %s220, 15
      %s222 = scalar_select %p221, %s220, 15
      %s223 = smul.addr %s222, 8
      %s224 = scalar_lea.vmem %s4, %s223
      %s225 = smul.u32 2, %s19
      %p226 = scmp.lt.s32.totalorder %s225, 3
      %s227 = scalar_select %p226, %s225, 3
      %p228 = scmp.lt.s32.totalorder %s20, 0
      %s229 = scalar_select %p228, %s20, 0
      %s230 = sadd.s32 %s229, %s227
      %s231 = smul.addr %s230, 8
      %s232 = scalar_lea.vmem %s0, %s231
      %s233 = smul.u32 2, %s19
      %s234 = smul.u32 8, %s19
      %p235 = scmp.lt.s32.totalorder %s234, 15
      %s236 = scalar_select %p235, %s234, 15
      %s237 = smul.addr %s236, 8
      %s238 = scalar_lea.vmem %s2, %s237
      %s239 = smul.u32 8, %s19
      %s240 = smul.u32 8, %s19
      %p241 = scmp.lt.s32.totalorder %s240, 15
      %s242 = scalar_select %p241, %s240, 15
      %s243 = smul.addr %s242, 8
      %s244 = scalar_lea.vmem %s4, %s243
      %s245 = smul.u32 8, %s19
      %p247 = scmp.eq.s32.totalorder %s20, 0
      // Predicated region
      $region37: #{gcn_forward.5} parent=35 // pred_check
        %p248 = pneg %p247
      $region38: #{gcn_forward.5} parent=35 // pred_check_branch
        %250 = sbr.rel (%p248) target = $region40
      $region39: #{gcn_forward.5} parent=35 // pred_region
        %251 = vst [vmem:[#allocation2] sm:$0xff] 0.0
        %252 = vst [vmem:[#allocation2 + $0x8] sm:$0xff] 0.0
        %253 = vst [vmem:[#allocation2 + $0x10] sm:$0xff] 0.0
        %254 = vst [vmem:[#allocation2 + $0x18] sm:$0xff] 0.0
        %255 = vst [vmem:[#allocation2 + $0x20] sm:$0xff] 0.0
        %256 = vst [vmem:[#allocation2 + $0x28] sm:$0xff] 0.0
        %257 = vst [vmem:[#allocation2 + $0x30] sm:$0xff] 0.0
        %258 = vst [vmem:[#allocation2 + $0x38] sm:$0xff] 0.0
      $region40: #{gcn_forward.5} parent=35 // pred_fallthru
        _
      %v259 = vld [vmem:[%s232] sm:$0xff]
      %v260 = vld [vmem:[%s232 + $0x8] sm:$0xff]
      %v261 = vunpack.c.l.s8.bf16 %v259
      %v262 = vunpack.c.h.s8.bf16 %v259
      %v263 = vunpack.c.l.s8.bf16 %v260
      %v264 = vunpack.c.h.s8.bf16 %v260
      %s265 = smul.u32 %s20, 128
      %s266 = sshra.s32 %s265, 3
      %s267 = sand.u32 %s265, 7
      %s268 = smul.addr %s266, 4
      %s269 = scalar_lea.vmem %s1, %s268
      %v270 = vld [vmem:[%s269] sm:$0xf]
      %v271 = vld [vmem:[%s269 + $0x4] sm:$0xf]
      %v272 = vld [vmem:[%s269 + $0x8] sm:$0xf]
      %v273 = vld [vmem:[%s269 + $0xc] sm:$0xf]
      %v274 = vld [vmem:[%s269 + $0x10] sm:$0xf]
      %v275 = vld [vmem:[%s269 + $0x14] sm:$0xf]
      %v276 = vld [vmem:[%s269 + $0x18] sm:$0xf]
      %v277 = vld [vmem:[%s269 + $0x1c] sm:$0xf]
      %v278 = vld [vmem:[%s269 + $0x20] sm:$0xf]
      %v279 = vld [vmem:[%s269 + $0x24] sm:$0xf]
      %v280 = vld [vmem:[%s269 + $0x28] sm:$0xf]
      %v281 = vld [vmem:[%s269 + $0x2c] sm:$0xf]
      %v282 = vld [vmem:[%s269 + $0x30] sm:$0xf]
      %v283 = vld [vmem:[%s269 + $0x34] sm:$0xf]
      %v284 = vld [vmem:[%s269 + $0x38] sm:$0xf]
      %v285 = vld [vmem:[%s269 + $0x3c] sm:$0xf]
      %v286 = vld [vmem:[#allocation2] sm:$0xff]
      %v287 = vld [vmem:[#allocation2 + $0x8] sm:$0xff]
      %v288 = vld [vmem:[#allocation2 + $0x10] sm:$0xff]
      %v289 = vld [vmem:[#allocation2 + $0x18] sm:$0xff]
      %v290 = vld [vmem:[#allocation2 + $0x20] sm:$0xff]
      %v291 = vld [vmem:[#allocation2 + $0x28] sm:$0xff]
      %v292 = vld [vmem:[#allocation2 + $0x30] sm:$0xff]
      %v293 = vld [vmem:[#allocation2 + $0x38] sm:$0xff]
      %v310 = vunpack.c.l.b16 %v270
      %v311 = vunpack.c.l.b16 %v271
      %v312 = vunpack.c.l.b16 %v272
      %v313 = vunpack.c.l.b16 %v273
      %v314 = vunpack.c.l.b16 %v274
      %v315 = vunpack.c.l.b16 %v275
      %v316 = vunpack.c.l.b16 %v276
      %v317 = vunpack.c.l.b16 %v277
      %v318 = vunpack.c.l.b16 %v278
      %v319 = vunpack.c.l.b16 %v279
      %v320 = vunpack.c.l.b16 %v280
      %v321 = vunpack.c.l.b16 %v281
      %v322 = vunpack.c.l.b16 %v282
      %v323 = vunpack.c.l.b16 %v283
      %v324 = vunpack.c.l.b16 %v284
      %v325 = vunpack.c.l.b16 %v285
      %v326 = vpack.c.b16 %v311, %v310
      %v327 = vpack.c.b16 %v313, %v312
      %v328 = vpack.c.b16 %v315, %v314
      %v329 = vpack.c.b16 %v317, %v316
      %v330 = vpack.c.b16 %v319, %v318
      %v331 = vpack.c.b16 %v321, %v320
      %v332 = vpack.c.b16 %v323, %v322
      %v333 = vpack.c.b16 %v325, %v324
      %342 = vmatprep.subr.bf16.mxu0 0
      %343 = vmatpush1.bf16.msra.mxu0 %v333
      %344 = vmatprep.subr.bf16.mxu0 0
      %345 = vmatpush1.bf16.msra.mxu0 %v332
      %346 = vmatprep.subr.bf16.mxu0 0
      %347 = vmatpush1.bf16.msra.mxu0 %v331
      %348 = vmatprep.subr.bf16.mxu0 0
      %349 = vmatpush1.bf16.msra.mxu0 %v330
      %350 = vmatprep.subr.bf16.mxu0 0
      %351 = vmatpush1.bf16.msra.mxu0 %v329
      %352 = vmatprep.subr.bf16.mxu0 0
      %353 = vmatpush1.bf16.msra.mxu0 %v328
      %354 = vmatprep.subr.bf16.mxu0 0
      %355 = vmatpush1.bf16.msra.mxu0 %v327
      %356 = vmatprep.subr.bf16.mxu0 0
      %357 = vmatpush1.bf16.msra.mxu0 %v326
      %358 = vmatprep.subr.bf16.mxu0 0
      %359 = vmatpush2.bf16.msra.mxu0 0
      %360 = vmatprep.subr.bf16.mxu0 0
      %361 = vmatpush2.bf16.msra.mxu0 0
      %362 = vmatprep.subr.bf16.mxu0 0
      %363 = vmatpush2.bf16.msra.mxu0 0
      %364 = vmatprep.subr.bf16.mxu0 0
      %365 = vmatpush2.bf16.msra.mxu0 0
      %366 = vmatprep.subr.bf16.mxu0 0
      %367 = vmatpush2.bf16.msra.mxu0 0
      %368 = vmatprep.subr.bf16.mxu0 0
      %369 = vmatpush2.bf16.msra.mxu0 0
      %370 = vmatprep.subr.bf16.mxu0 0
      %371 = vmatpush2.bf16.msra.mxu0 0
      %372 = vmatprep.subr.bf16.mxu0 0
      %373 = vmatpush2.bf16.msra.mxu0 0
      %374 = vmatprep.mubr.bf16.mxu0 0
      %375 = vmatmul.mubr.bf16.gmra.mxu0 %v261
      %v376 = vpop.f32.mrf.mxu0
      %v377 = vadd.f32 0.0, %v376
      %v378 = vpop.f32.mrf.mxu0
      %v379 = vpop.f32.mrf.mxu0
      %v380 = vadd.f32 0.0, %v379
      %v381 = vpop.f32.mrf.mxu0
      %382 = vmatprep.mubr.bf16.mxu0 0
      %383 = vmatmul.mubr.bf16.gmra.mxu0 %v262
      %v384 = vpop.f32.mrf.mxu0
      %v385 = vadd.f32 0.0, %v384
      %v386 = vpop.f32.mrf.mxu0
      %v387 = vpop.f32.mrf.mxu0
      %v388 = vadd.f32 0.0, %v387
      %v389 = vpop.f32.mrf.mxu0
      %390 = vmatprep.mubr.bf16.mxu0 0
      %391 = vmatmul.mubr.bf16.gmra.mxu0 %v263
      %v392 = vpop.f32.mrf.mxu0
      %v393 = vadd.f32 0.0, %v392
      %v394 = vpop.f32.mrf.mxu0
      %v395 = vpop.f32.mrf.mxu0
      %v396 = vadd.f32 0.0, %v395
      %v397 = vpop.f32.mrf.mxu0
      %398 = vmatprep.mubr.bf16.mxu0 0
      %399 = vmatmul.mubr.bf16.gmra.mxu0 %v264
      %v400 = vpop.f32.mrf.mxu0
      %v401 = vadd.f32 0.0, %v400
      %v402 = vpop.f32.mrf.mxu0
      %v403 = vpop.f32.mrf.mxu0
      %v404 = vadd.f32 0.0, %v403
      %v405 = vpop.f32.mrf.mxu0
      %406 = vdwg.mxu0
      %v407 = vadd.f32 %v286, %v377
      %v408 = vadd.f32 %v287, %v380
      %v409 = vadd.f32 %v288, %v385
      %v410 = vadd.f32 %v289, %v388
      %v411 = vadd.f32 %v290, %v393
      %v412 = vadd.f32 %v291, %v396
      %v413 = vadd.f32 %v292, %v401
      %v414 = vadd.f32 %v293, %v404
      %415 = vst [vmem:[#allocation2] sm:$0xff] %v407
      %416 = vst [vmem:[#allocation2 + $0x8] sm:$0xff] %v408
      %417 = vst [vmem:[#allocation2 + $0x10] sm:$0xff] %v409
      %418 = vst [vmem:[#allocation2 + $0x18] sm:$0xff] %v410
      %419 = vst [vmem:[#allocation2 + $0x20] sm:$0xff] %v411
      %420 = vst [vmem:[#allocation2 + $0x28] sm:$0xff] %v412
      %421 = vst [vmem:[#allocation2 + $0x30] sm:$0xff] %v413
      %422 = vst [vmem:[#allocation2 + $0x38] sm:$0xff] %v414
      // Predicated region
      $region41: #{gcn_forward.5} parent=35 // pred_check
        %p423 = pneg %p247
      $region42: #{gcn_forward.5} parent=35 // pred_check_branch
        %425 = sbr.rel (%p423) target = $region44
      $region43: #{gcn_forward.5} parent=35 // pred_region
        %v426 = vld [vmem:[#allocation2] sm:$0xff]
        %v427 = vld [vmem:[#allocation2 + $0x8] sm:$0xff]
        %v428 = vld [vmem:[#allocation2 + $0x10] sm:$0xff]
        %v429 = vld [vmem:[#allocation2 + $0x18] sm:$0xff]
        %v430 = vld [vmem:[#allocation2 + $0x20] sm:$0xff]
        %v431 = vld [vmem:[#allocation2 + $0x28] sm:$0xff]
        %v432 = vld [vmem:[#allocation2 + $0x30] sm:$0xff]
        %v433 = vld [vmem:[#allocation2 + $0x38] sm:$0xff]
        %v434 = vld [vmem:[%s238] sm:$0xff]
        %v435 = vld [vmem:[%s238 + $0x8] sm:$0xff]
        %v436 = vld [vmem:[%s238 + $0x10] sm:$0xff]
        %v437 = vld [vmem:[%s238 + $0x18] sm:$0xff]
        %v438 = vld [vmem:[%s238 + $0x20] sm:$0xff]
        %v439 = vld [vmem:[%s238 + $0x28] sm:$0xff]
        %v440 = vld [vmem:[%s238 + $0x30] sm:$0xff]
        %v441 = vld [vmem:[%s238 + $0x38] sm:$0xff]
        %443 = vset.pattern.permute.xlu0 0
        %444 = vperm.xlu0 %443, %v434
        %v445 = vpop.permute.xlu0 %444
        %448 = vset.pattern.permute.xlu0 0
        %449 = vperm.xlu0 %448, %v435
        %v450 = vpop.permute.xlu0 %449
        %453 = vset.pattern.permute.xlu0 0
        %454 = vperm.xlu0 %453, %v436
        %v455 = vpop.permute.xlu0 %454
        %458 = vset.pattern.permute.xlu0 0
        %459 = vperm.xlu0 %458, %v437
        %v460 = vpop.permute.xlu0 %459
        %463 = vset.pattern.permute.xlu0 0
        %464 = vperm.xlu0 %463, %v438
        %v465 = vpop.permute.xlu0 %464
        %468 = vset.pattern.permute.xlu0 0
        %469 = vperm.xlu0 %468, %v439
        %v470 = vpop.permute.xlu0 %469
        %473 = vset.pattern.permute.xlu0 0
        %474 = vperm.xlu0 %473, %v440
        %v475 = vpop.permute.xlu0 %474
        %478 = vset.pattern.permute.xlu0 0
        %479 = vperm.xlu0 %478, %v441
        %v480 = vpop.permute.xlu0 %479
        %v482 = vmul.f32 %v426, %v445
        %v483 = vmul.f32 %v427, %v450
        %v484 = vmul.f32 %v428, %v455
        %v485 = vmul.f32 %v429, %v460
        %v486 = vmul.f32 %v430, %v465
        %v487 = vmul.f32 %v431, %v470
        %v488 = vmul.f32 %v432, %v475
        %v489 = vmul.f32 %v433, %v480
        %v490 = vld [vmem:[%s3] sm:$0x1]
        %v492 = vlaneseq
        %v493 = vshrl.u32 %v492, 7
        %v494 = vsub.s32 0, %v493
        %v495 = vrot.slane %v490, %v494
        %v497 = vadd.f32 %v482, %v495
        %v498 = vadd.f32 %v483, %v495
        %v499 = vadd.f32 %v484, %v495
        %v500 = vadd.f32 %v485, %v495
        %v501 = vadd.f32 %v486, %v495
        %v502 = vadd.f32 %v487, %v495
        %v503 = vadd.f32 %v488, %v495
        %v504 = vadd.f32 %v489, %v495
        %v505 = vmax.f32 %v497, 0.0
        %v506 = vmax.f32 %v498, 0.0
        %v507 = vmax.f32 %v499, 0.0
        %v508 = vmax.f32 %v500, 0.0
        %v509 = vmax.f32 %v501, 0.0
        %v510 = vmax.f32 %v502, 0.0
        %v511 = vmax.f32 %v503, 0.0
        %v512 = vmax.f32 %v504, 0.0
        %513 = vst [vmem:[%s244] sm:$0xff] %v505
        %514 = vst [vmem:[%s244 + $0x8] sm:$0xff] %v506
        %515 = vst [vmem:[%s244 + $0x10] sm:$0xff] %v507
        %516 = vst [vmem:[%s244 + $0x18] sm:$0xff] %v508
        %517 = vst [vmem:[%s244 + $0x20] sm:$0xff] %v509
        %518 = vst [vmem:[%s244 + $0x28] sm:$0xff] %v510
        %519 = vst [vmem:[%s244 + $0x30] sm:$0xff] %v511
        %520 = vst [vmem:[%s244 + $0x38] sm:$0xff] %v512
      $region44: #{gcn_forward.5} parent=35 // pred_fallthru
        _
      %s521 = smul.u32 8, %s19
      %p522 = scmp.lt.s32.totalorder %s521, 15
      %s523 = scalar_select %p522, %s521, 15
      %s524 = smul.addr %s523, 8
      %s525 = scalar_lea.vmem %s4, %s524
      // Predicated region
      $region45: #{gcn_forward.5} parent=35 // pred_check
        %p526 = pneg %p141
      $region46: #{gcn_forward.5} parent=35 // pred_check_branch
        %528 = sbr.rel (%p526) target = $region48
      $region47: #{gcn_forward.5} parent=35 // pred_region
        %s529 = smul.u32 8, %s19
      $region48: #{gcn_forward.5} parent=35 // pred_fallthru
        _
    $region36: #{gcn_forward.5} parent=5 // pred_fallthru
      _
    %p530 = scmp.le.s32.totalorder 2, %s10
    // Predicated region
    $region49: #{gcn_forward.5} parent=5 // pred_check
      %p531 = pneg %p530
    $region50: #{gcn_forward.5} parent=5 // pred_check_branch
      %533 = sbr.rel (%p531) target = $region52
    $region51: #{gcn_forward.5} parent=5 // pred_region
      %s534 = ssub.s32 %s10, 2
      // Predicated region
      $region53: #{gcn_forward.5} parent=51 // pred_check
        %p535 = pneg %p147
      $region54: #{gcn_forward.5} parent=51 // pred_check_branch
        %537 = sbr.rel (%p535) target = $region56
      $region55: #{gcn_forward.5} parent=51 // pred_region
        %s538 = smul.u32 8, %s21
        %p539 = scmp.lt.s32.totalorder %s538, 15
        %s540 = scalar_select %p539, %s538, 15
        %s541 = smul.addr %s540, 8
        %s542 = scalar_lea.vmem %s4, %s541
      $region56: #{gcn_forward.5} parent=51 // pred_fallthru
        _
    $region52: #{gcn_forward.5} parent=5 // pred_fallthru
      _
  $region6: #{gcn_forward.5} parent=0 // loop_footer
    %s14 = sadd.s32 1, %s10
  $region7: #{gcn_forward.5} parent=0 // loop_footer_branch
    %9 = sbr.rel target = $region3
  $region8: #{gcn_forward.5} parent=0 // loop_exit
    _

// kernel: gcn_forward.4
$region0: #{gcn_forward.4}
  #allocation0 [shape = 'u32[]', space=smem, size = 0x4, offset = 0x4, fixed_abs, tag = 'smem constant byte address 0x4 - core index']
  #allocation1 [shape = 'u32[144,128]{1,0:T(1,128)}', space=vmem, size = 0x12000, scoped, tag = 'internal scratch']
  #allocation2 [shape = 'f32[64,128]{1,0:T(8,128)}', space=vmem, size = 0x8000, scoped, tag = 'scratch operand']
  %s0 = inlined_call_operand.vmem [shape: s8[128,128], index: 0, kind: input, shape index: {}]
  %s1 = inlined_call_operand.vmem [shape: bf16[128,128], index: 1, kind: input, shape index: {}]
  %s2 = inlined_call_operand.vmem [shape: f32[128,1], index: 2, kind: input, shape index: {}]
  %s3 = inlined_call_operand.vmem [shape: f32[1,128], index: 3, kind: input, shape index: {}]
  %s4 = inlined_call_operand.vmem [shape: f32[128,128], index: 4, kind: input, shape index: {}]
  %s5 = inlined_call_operand.vmem [shape: bf16[128,128], index: 5, kind: output, shape index: {}]
  %s6 = sld [smem:[#allocation0]]
  $region61: #{gcn_forward.4} parent=0
    _
  %s8 = ssub.s32 1, %s6
  %s9 = scalar_select 0, %s8, %s6
  loop: start=0, step=1, limit=4
  $region2: #{gcn_forward.4} parent=0 // loop_pre_header
    _
  $region3: #{gcn_forward.4} parent=0 // loop_header
    %s11 = sphi 0, %s15
    %p12 = scmp.ge.s32.totalorder %s11, 4
    %s18 = sphi 0, %s30
    %s19 = sphi 0, %s26
    %s20 = sphi 0, %s18
    %s21 = sphi 0, %s19
    %s22 = sphi 0, %s20
    %s23 = sphi 0, %s21
    %s35 = sphi 0, %s37
    %s38 = sphi 0, %s35
    %s39 = sphi 0, %s38
    %s55 = sphi 0, %s39
    %s59 = sphi 0, %s59
    %s61 = sphi 0, %s59
    %s62 = sphi 0, %s61
    %s76 = sphi 0, %s62
    %s82 = sphi 0, %s84
    %s85 = sphi 0, %s82
    %s86 = sphi 0, %s85
    %s102 = sphi 0, %s86
    %s106 = sphi 0, %s106
    %s108 = sphi 0, %s106
    %s109 = sphi 0, %s108
    %s123 = sphi 0, %s109
    %s127 = sphi 0, %s127
    %s129 = sphi 0, %s127
    %s130 = sphi 0, %s129
    %s144 = sphi 0, %s130
    %s150 = sphi 0, %s152
    %s153 = sphi 0, %s150
    %s154 = sphi 0, %s153
    %s170 = sphi 0, %s154
  $region4: #{gcn_forward.4} parent=0 // loop_header_branch
    %14 = sbr.rel (%p12) target = $region8
  $region5: #{gcn_forward.4} parent=0 // loop_body
    %s16 = ssub.s32 %s11, 1
    %s17 = ssub.s32 %s11, 2
    %s24 = sadd.s32 1, %s19
    %p25 = scmp.ge.s32.totalorder %s24, 1
    %s26 = scalar_select %p25, 0, %s24
    %s27 = sadd.s32 1, %s18
    %s28 = scalar_select %p25, %s27, %s18
    %p29 = scmp.ge.s32.totalorder %s28, 2
    %s30 = scalar_select %p29, 0, %s28
    %s31 = ssub.s32 %s18, %s30
    %s32 = ssub.s32 %s19, %s26
    %s33 = sor.u32 %s31, %s32
    %p34 = scmp.eq.s32.totalorder %s33, 0
    %s36 = sadd.s32 %s35, 1
    %s37 = scalar_select %p34, %s35, %s36
    %p40 = pneg %p34
    %p41 = scmp.eq.s32.totalorder %s11, 1
    %p42 = por %p40, %p41
    %p43 = scmp.ne.s32.totalorder %s35, %s38
    %p44 = scmp.eq.s32.totalorder %s11, 0
    %p45 = por %p43, %p44
    %p46 = scmp.ne.s32.totalorder %s35, %s38
    %p47 = scmp.eq.s32.totalorder %s16, 1
    %p48 = por %p46, %p47
    %p49 = scmp.ne.s32.totalorder %s38, %s39
    %p50 = scmp.eq.s32.totalorder %s16, 0
    %p51 = por %p49, %p50
    %p52 = scmp.ne.s32.totalorder %s38, %s39
    %p53 = scmp.eq.s32.totalorder %s17, 1
    %p54 = por %p52, %p53
    %p56 = scmp.ne.s32.totalorder %s39, %s55
    %p57 = scmp.eq.s32.totalorder %s17, 0
    %p58 = por %p56, %p57
    %s60 = sadd.s32 %s59, 1
    %p63 = scmp.eq.s32.totalorder %s11, 1
    %p64 = scmp.ne.s32.totalorder %s59, %s61
    %p65 = scmp.eq.s32.totalorder %s11, 0
    %p66 = por %p64, %p65
    %p67 = scmp.ne.s32.totalorder %s59, %s61
    %p68 = scmp.eq.s32.totalorder %s16, 1
    %p69 = por %p67, %p68
    %p70 = scmp.ne.s32.totalorder %s61, %s62
    %p71 = scmp.eq.s32.totalorder %s16, 0
    %p72 = por %p70, %p71
    %p73 = scmp.ne.s32.totalorder %s61, %s62
    %p74 = scmp.eq.s32.totalorder %s17, 1
    %p75 = por %p73, %p74
    %p77 = scmp.ne.s32.totalorder %s62, %s76
    %p78 = scmp.eq.s32.totalorder %s17, 0
    %p79 = por %p77, %p78
    %s80 = ssub.s32 %s18, %s30
    %p81 = scmp.eq.s32.totalorder %s80, 0
    %s83 = sadd.s32 %s82, 1
    %s84 = scalar_select %p81, %s82, %s83
    %p87 = pneg %p81
    %p88 = scmp.eq.s32.totalorder %s11, 1
    %p89 = por %p87, %p88
    %p90 = scmp.ne.s32.totalorder %s82, %s85
    %p91 = scmp.eq.s32.totalorder %s11, 0
    %p92 = por %p90, %p91
    %p93 = scmp.ne.s32.totalorder %s82, %s85
    %p94 = scmp.eq.s32.totalorder %s16, 1
    %p95 = por %p93, %p94
    %p96 = scmp.ne.s32.totalorder %s85, %s86
    %p97 = scmp.eq.s32.totalorder %s16, 0
    %p98 = por %p96, %p97
    %p99 = scmp.ne.s32.totalorder %s85, %s86
    %p100 = scmp.eq.s32.totalorder %s17, 1
    %p101 = por %p99, %p100
    %p103 = scmp.ne.s32.totalorder %s86, %s102
    %p104 = scmp.eq.s32.totalorder %s17, 0
    %p105 = por %p103, %p104
    %s107 = sadd.s32 %s106, 1
    %p110 = scmp.eq.s32.totalorder %s11, 1
    %p111 = scmp.ne.s32.totalorder %s106, %s108
    %p112 = scmp.eq.s32.totalorder %s11, 0
    %p113 = por %p111, %p112
    %p114 = scmp.ne.s32.totalorder %s106, %s108
    %p115 = scmp.eq.s32.totalorder %s16, 1
    %p116 = por %p114, %p115
    %p117 = scmp.ne.s32.totalorder %s108, %s109
    %p118 = scmp.eq.s32.totalorder %s16, 0
    %p119 = por %p117, %p118
    %p120 = scmp.ne.s32.totalorder %s108, %s109
    %p121 = scmp.eq.s32.totalorder %s17, 1
    %p122 = por %p120, %p121
    %p124 = scmp.ne.s32.totalorder %s109, %s123
    %p125 = scmp.eq.s32.totalorder %s17, 0
    %p126 = por %p124, %p125
    %s128 = sadd.s32 %s127, 1
    %p131 = scmp.eq.s32.totalorder %s11, 1
    %p132 = scmp.ne.s32.totalorder %s127, %s129
    %p133 = scmp.eq.s32.totalorder %s11, 0
    %p134 = por %p132, %p133
    %p135 = scmp.ne.s32.totalorder %s127, %s129
    %p136 = scmp.eq.s32.totalorder %s16, 1
    %p137 = por %p135, %p136
    %p138 = scmp.ne.s32.totalorder %s129, %s130
    %p139 = scmp.eq.s32.totalorder %s16, 0
    %p140 = por %p138, %p139
    %p141 = scmp.ne.s32.totalorder %s129, %s130
    %p142 = scmp.eq.s32.totalorder %s17, 1
    %p143 = por %p141, %p142
    %p145 = scmp.ne.s32.totalorder %s130, %s144
    %p146 = scmp.eq.s32.totalorder %s17, 0
    %p147 = por %p145, %p146
    %s148 = ssub.s32 %s18, %s30
    %p149 = scmp.eq.s32.totalorder %s148, 0
    %s151 = sadd.s32 %s150, 1
    %s152 = scalar_select %p149, %s150, %s151
    %p155 = pneg %p149
    %p156 = scmp.eq.s32.totalorder %s11, 1
    %p157 = por %p155, %p156
    %p158 = scmp.ne.s32.totalorder %s150, %s153
    %p159 = scmp.eq.s32.totalorder %s11, 0
    %p160 = por %p158, %p159
    %p161 = scmp.ne.s32.totalorder %s150, %s153
    %p162 = scmp.eq.s32.totalorder %s16, 1
    %p163 = por %p161, %p162
    %p164 = scmp.ne.s32.totalorder %s153, %s154
    %p165 = scmp.eq.s32.totalorder %s16, 0
    %p166 = por %p164, %p165
    %p167 = scmp.ne.s32.totalorder %s153, %s154
    %p168 = scmp.eq.s32.totalorder %s17, 1
    %p169 = por %p167, %p168
    %p171 = scmp.ne.s32.totalorder %s154, %s170
    %p172 = scmp.eq.s32.totalorder %s17, 0
    %p173 = por %p171, %p172
    %p174 = scmp.le.s32.totalorder 1, %s11
    %p175 = scmp.lt.s32.totalorder %s11, 3
    %p176 = pnand %p174, %p175
    %p177 = pneg %p176
    // Predicated region
    $region9: #{gcn_forward.4} parent=5 // pred_check
      _
    $region10: #{gcn_forward.4} parent=5 // pred_check_branch
      %179 = sbr.rel (%p176) target = $region12
    $region11: #{gcn_forward.4} parent=5 // pred_region
      %s180 = ssub.s32 %s11, 1
      // Predicated region
      $region13: #{gcn_forward.4} parent=11 // pred_check
        %p181 = pneg %p72
      $region14: #{gcn_forward.4} parent=11 // pred_check_branch
        %183 = sbr.rel (%p181) target = $region16
      $region15: #{gcn_forward.4} parent=11 // pred_region
        _
      $region16: #{gcn_forward.4} parent=11 // pred_fallthru
        _
      // Predicated region
      $region17: #{gcn_forward.4} parent=11 // pred_check
        %p184 = pneg %p119
      $region18: #{gcn_forward.4} parent=11 // pred_check_branch
        %186 = sbr.rel (%p184) target = $region20
      $region19: #{gcn_forward.4} parent=11 // pred_region
        _
      $region20: #{gcn_forward.4} parent=11 // pred_fallthru
        _
      // Predicated region
      $region21: #{gcn_forward.4} parent=11 // pred_check
        %p187 = pneg %p140
      $region22: #{gcn_forward.4} parent=11 // pred_check_branch
        %189 = sbr.rel (%p187) target = $region24
      $region23: #{gcn_forward.4} parent=11 // pred_region
        _
      $region24: #{gcn_forward.4} parent=11 // pred_fallthru
        _
    $region12: #{gcn_forward.4} parent=5 // pred_fallthru
      _
    %p190 = scmp.lt.s32.totalorder %s11, 2
    // Predicated region
    $region25: #{gcn_forward.4} parent=5 // pred_check
      %p191 = pneg %p190
    $region26: #{gcn_forward.4} parent=5 // pred_check_branch
      %193 = sbr.rel (%p191) target = $region28
    $region27: #{gcn_forward.4} parent=5 // pred_region
      // Predicated region
      $region29: #{gcn_forward.4} parent=27 // pred_check
        %p194 = pneg %p45
      $region30: #{gcn_forward.4} parent=27 // pred_check_branch
        %196 = sbr.rel (%p194) target = $region32
      $region31: #{gcn_forward.4} parent=27 // pred_region
        %s197 = smul.u32 2, %s18
        %p198 = scmp.lt.s32.totalorder %s197, 3
        %s199 = scalar_select %p198, %s197, 3
        %p200 = scmp.lt.s32.totalorder %s19, 0
        %s201 = scalar_select %p200, %s19, 0
        %s202 = sadd.s32 %s201, %s199
        %s203 = smul.addr %s202, 8
        %s204 = scalar_lea.vmem %s0, %s203
        %s205 = smul.u32 2, %s18
      $region32: #{gcn_forward.4} parent=27 // pred_fallthru
        _
      // Predicated region
      $region33: #{gcn_forward.4} parent=27 // pred_check
        %p206 = pneg %p92
      $region34: #{gcn_forward.4} parent=27 // pred_check_branch
        %208 = sbr.rel (%p206) target = $region36
      $region35: #{gcn_forward.4} parent=27 // pred_region
        %s209 = smul.u32 8, %s18
        %p210 = scmp.lt.s32.totalorder %s209, 15
        %s211 = scalar_select %p210, %s209, 15
        %s212 = smul.addr %s211, 8
        %s213 = scalar_lea.vmem %s2, %s212
        %s214 = smul.u32 8, %s18
      $region36: #{gcn_forward.4} parent=27 // pred_fallthru
        _
    $region28: #{gcn_forward.4} parent=5 // pred_fallthru
      _
    %p215 = scmp.le.s32.totalorder 1, %s11
    %p216 = scmp.lt.s32.totalorder %s11, 3
    %p217 = pnand %p215, %p216
    %p218 = pneg %p217
    // Predicated region
    $region37: #{gcn_forward.4} parent=5 // pred_check
      _
    $region38: #{gcn_forward.4} parent=5 // pred_check_branch
      %220 = sbr.rel (%p217) target = $region40
    $region39: #{gcn_forward.4} parent=5 // pred_region
      %s221 = ssub.s32 %s11, 1
      %s222 = smul.u32 2, %s20
      %p223 = scmp.lt.s32.totalorder %s222, 3
      %s224 = scalar_select %p223, %s222, 3
      %p225 = scmp.lt.s32.totalorder %s21, 0
      %s226 = scalar_select %p225, %s21, 0
      %s227 = sadd.s32 %s226, %s224
      %s228 = smul.addr %s227, 8
      %s229 = scalar_lea.vmem %s0, %s228
      %p230 = pneg %p51
      %p231 = pneg %p48
      %p232 = pneg %p72
      %p233 = pneg %p69
      %s234 = smul.u32 8, %s20
      %p235 = scmp.lt.s32.totalorder %s234, 15
      %s236 = scalar_select %p235, %s234, 15
      %s237 = smul.addr %s236, 8
      %s238 = scalar_lea.vmem %s2, %s237
      %p239 = pneg %p98
      %p240 = pneg %p95
      %p241 = pneg %p119
      %p242 = pneg %p116
      %p243 = pneg %p140
      %p244 = pneg %p137
      %p245 = pneg %p166
      %p246 = pneg %p163
      %s247 = smul.u32 8, %s20
      %p248 = scmp.lt.s32.totalorder %s247, 15
      %s249 = scalar_select %p248, %s247, 15
      %s250 = smul.addr %s249, 4
      %s251 = scalar_lea.vmem %s5, %s250
      %s252 = smul.u32 2, %s20
      %p253 = scmp.lt.s32.totalorder %s252, 3
      %s254 = scalar_select %p253, %s252, 3
      %p255 = scmp.lt.s32.totalorder %s21, 0
      %s256 = scalar_select %p255, %s21, 0
      %s257 = sadd.s32 %s256, %s254
      %s258 = smul.addr %s257, 8
      %s259 = scalar_lea.vmem %s0, %s258
      %s260 = smul.u32 2, %s20
      %s261 = smul.u32 8, %s20
      %p262 = scmp.lt.s32.totalorder %s261, 15
      %s263 = scalar_select %p262, %s261, 15
      %s264 = smul.addr %s263, 8
      %s265 = scalar_lea.vmem %s2, %s264
      %s266 = smul.u32 8, %s20
      %s267 = smul.u32 8, %s20
      %p268 = scmp.lt.s32.totalorder %s267, 15
      %s269 = scalar_select %p268, %s267, 15
      %s270 = smul.addr %s269, 4
      %s271 = scalar_lea.vmem %s5, %s270
      %s272 = smul.u32 8, %s20
      %p274 = scmp.eq.s32.totalorder %s21, 0
      // Predicated region
      $region41: #{gcn_forward.4} parent=39 // pred_check
        %p275 = pneg %p274
      $region42: #{gcn_forward.4} parent=39 // pred_check_branch
        %277 = sbr.rel (%p275) target = $region44
      $region43: #{gcn_forward.4} parent=39 // pred_region
        %278 = vst [vmem:[#allocation2] sm:$0xff] 0.0
        %279 = vst [vmem:[#allocation2 + $0x8] sm:$0xff] 0.0
        %280 = vst [vmem:[#allocation2 + $0x10] sm:$0xff] 0.0
        %281 = vst [vmem:[#allocation2 + $0x18] sm:$0xff] 0.0
        %282 = vst [vmem:[#allocation2 + $0x20] sm:$0xff] 0.0
        %283 = vst [vmem:[#allocation2 + $0x28] sm:$0xff] 0.0
        %284 = vst [vmem:[#allocation2 + $0x30] sm:$0xff] 0.0
        %285 = vst [vmem:[#allocation2 + $0x38] sm:$0xff] 0.0
      $region44: #{gcn_forward.4} parent=39 // pred_fallthru
        _
      %v286 = vld [vmem:[%s259] sm:$0xff]
      %v287 = vld [vmem:[%s259 + $0x8] sm:$0xff]
      %v288 = vunpack.c.l.s8.bf16 %v286
      %v289 = vunpack.c.h.s8.bf16 %v286
      %v290 = vunpack.c.l.s8.bf16 %v287
      %v291 = vunpack.c.h.s8.bf16 %v287
      %s292 = smul.u32 %s21, 128
      %s293 = sshra.s32 %s292, 3
      %s294 = sand.u32 %s292, 7
      %s295 = smul.addr %s293, 4
      %s296 = scalar_lea.vmem %s1, %s295
      %v297 = vld [vmem:[%s296] sm:$0xf]
      %v298 = vld [vmem:[%s296 + $0x4] sm:$0xf]
      %v299 = vld [vmem:[%s296 + $0x8] sm:$0xf]
      %v300 = vld [vmem:[%s296 + $0xc] sm:$0xf]
      %v301 = vld [vmem:[%s296 + $0x10] sm:$0xf]
      %v302 = vld [vmem:[%s296 + $0x14] sm:$0xf]
      %v303 = vld [vmem:[%s296 + $0x18] sm:$0xf]
      %v304 = vld [vmem:[%s296 + $0x1c] sm:$0xf]
      %v305 = vld [vmem:[%s296 + $0x20] sm:$0xf]
      %v306 = vld [vmem:[%s296 + $0x24] sm:$0xf]
      %v307 = vld [vmem:[%s296 + $0x28] sm:$0xf]
      %v308 = vld [vmem:[%s296 + $0x2c] sm:$0xf]
      %v309 = vld [vmem:[%s296 + $0x30] sm:$0xf]
      %v310 = vld [vmem:[%s296 + $0x34] sm:$0xf]
      %v311 = vld [vmem:[%s296 + $0x38] sm:$0xf]
      %v312 = vld [vmem:[%s296 + $0x3c] sm:$0xf]
      %v313 = vld [vmem:[#allocation2] sm:$0xff]
      %v314 = vld [vmem:[#allocation2 + $0x8] sm:$0xff]
      %v315 = vld [vmem:[#allocation2 + $0x10] sm:$0xff]
      %v316 = vld [vmem:[#allocation2 + $0x18] sm:$0xff]
      %v317 = vld [vmem:[#allocation2 + $0x20] sm:$0xff]
      %v318 = vld [vmem:[#allocation2 + $0x28] sm:$0xff]
      %v319 = vld [vmem:[#allocation2 + $0x30] sm:$0xff]
      %v320 = vld [vmem:[#allocation2 + $0x38] sm:$0xff]
      %v337 = vunpack.c.l.b16 %v297
      %v338 = vunpack.c.l.b16 %v298
      %v339 = vunpack.c.l.b16 %v299
      %v340 = vunpack.c.l.b16 %v300
      %v341 = vunpack.c.l.b16 %v301
      %v342 = vunpack.c.l.b16 %v302
      %v343 = vunpack.c.l.b16 %v303
      %v344 = vunpack.c.l.b16 %v304
      %v345 = vunpack.c.l.b16 %v305
      %v346 = vunpack.c.l.b16 %v306
      %v347 = vunpack.c.l.b16 %v307
      %v348 = vunpack.c.l.b16 %v308
      %v349 = vunpack.c.l.b16 %v309
      %v350 = vunpack.c.l.b16 %v310
      %v351 = vunpack.c.l.b16 %v311
      %v352 = vunpack.c.l.b16 %v312
      %v353 = vpack.c.b16 %v338, %v337
      %v354 = vpack.c.b16 %v340, %v339
      %v355 = vpack.c.b16 %v342, %v341
      %v356 = vpack.c.b16 %v344, %v343
      %v357 = vpack.c.b16 %v346, %v345
      %v358 = vpack.c.b16 %v348, %v347
      %v359 = vpack.c.b16 %v350, %v349
      %v360 = vpack.c.b16 %v352, %v351
      %369 = vmatprep.subr.bf16.mxu0 0
      %370 = vmatpush1.bf16.msra.mxu0 %v360
      %371 = vmatprep.subr.bf16.mxu0 0
      %372 = vmatpush1.bf16.msra.mxu0 %v359
      %373 = vmatprep.subr.bf16.mxu0 0
      %374 = vmatpush1.bf16.msra.mxu0 %v358
      %375 = vmatprep.subr.bf16.mxu0 0
      %376 = vmatpush1.bf16.msra.mxu0 %v357
      %377 = vmatprep.subr.bf16.mxu0 0
      %378 = vmatpush1.bf16.msra.mxu0 %v356
      %379 = vmatprep.subr.bf16.mxu0 0
      %380 = vmatpush1.bf16.msra.mxu0 %v355
      %381 = vmatprep.subr.bf16.mxu0 0
      %382 = vmatpush1.bf16.msra.mxu0 %v354
      %383 = vmatprep.subr.bf16.mxu0 0
      %384 = vmatpush1.bf16.msra.mxu0 %v353
      %385 = vmatprep.subr.bf16.mxu0 0
      %386 = vmatpush2.bf16.msra.mxu0 0
      %387 = vmatprep.subr.bf16.mxu0 0
      %388 = vmatpush2.bf16.msra.mxu0 0
      %389 = vmatprep.subr.bf16.mxu0 0
      %390 = vmatpush2.bf16.msra.mxu0 0
      %391 = vmatprep.subr.bf16.mxu0 0
      %392 = vmatpush2.bf16.msra.mxu0 0
      %393 = vmatprep.subr.bf16.mxu0 0
      %394 = vmatpush2.bf16.msra.mxu0 0
      %395 = vmatprep.subr.bf16.mxu0 0
      %396 = vmatpush2.bf16.msra.mxu0 0
      %397 = vmatprep.subr.bf16.mxu0 0
      %398 = vmatpush2.bf16.msra.mxu0 0
      %399 = vmatprep.subr.bf16.mxu0 0
      %400 = vmatpush2.bf16.msra.mxu0 0
      %401 = vmatprep.mubr.bf16.mxu0 0
      %402 = vmatmul.mubr.bf16.gmra.mxu0 %v288
      %v403 = vpop.f32.mrf.mxu0
      %v404 = vadd.f32 0.0, %v403
      %v405 = vpop.f32.mrf.mxu0
      %v406 = vpop.f32.mrf.mxu0
      %v407 = vadd.f32 0.0, %v406
      %v408 = vpop.f32.mrf.mxu0
      %409 = vmatprep.mubr.bf16.mxu0 0
      %410 = vmatmul.mubr.bf16.gmra.mxu0 %v289
      %v411 = vpop.f32.mrf.mxu0
      %v412 = vadd.f32 0.0, %v411
      %v413 = vpop.f32.mrf.mxu0
      %v414 = vpop.f32.mrf.mxu0
      %v415 = vadd.f32 0.0, %v414
      %v416 = vpop.f32.mrf.mxu0
      %417 = vmatprep.mubr.bf16.mxu0 0
      %418 = vmatmul.mubr.bf16.gmra.mxu0 %v290
      %v419 = vpop.f32.mrf.mxu0
      %v420 = vadd.f32 0.0, %v419
      %v421 = vpop.f32.mrf.mxu0
      %v422 = vpop.f32.mrf.mxu0
      %v423 = vadd.f32 0.0, %v422
      %v424 = vpop.f32.mrf.mxu0
      %425 = vmatprep.mubr.bf16.mxu0 0
      %426 = vmatmul.mubr.bf16.gmra.mxu0 %v291
      %v427 = vpop.f32.mrf.mxu0
      %v428 = vadd.f32 0.0, %v427
      %v429 = vpop.f32.mrf.mxu0
      %v430 = vpop.f32.mrf.mxu0
      %v431 = vadd.f32 0.0, %v430
      %v432 = vpop.f32.mrf.mxu0
      %433 = vdwg.mxu0
      %v434 = vadd.f32 %v313, %v404
      %v435 = vadd.f32 %v314, %v407
      %v436 = vadd.f32 %v315, %v412
      %v437 = vadd.f32 %v316, %v415
      %v438 = vadd.f32 %v317, %v420
      %v439 = vadd.f32 %v318, %v423
      %v440 = vadd.f32 %v319, %v428
      %v441 = vadd.f32 %v320, %v431
      %442 = vst [vmem:[#allocation2] sm:$0xff] %v434
      %443 = vst [vmem:[#allocation2 + $0x8] sm:$0xff] %v435
      %444 = vst [vmem:[#allocation2 + $0x10] sm:$0xff] %v436
      %445 = vst [vmem:[#allocation2 + $0x18] sm:$0xff] %v437
      %446 = vst [vmem:[#allocation2 + $0x20] sm:$0xff] %v438
      %447 = vst [vmem:[#allocation2 + $0x28] sm:$0xff] %v439
      %448 = vst [vmem:[#allocation2 + $0x30] sm:$0xff] %v440
      %449 = vst [vmem:[#allocation2 + $0x38] sm:$0xff] %v441
      // Predicated region
      $region45: #{gcn_forward.4} parent=39 // pred_check
        %p450 = pneg %p274
      $region46: #{gcn_forward.4} parent=39 // pred_check_branch
        %452 = sbr.rel (%p450) target = $region48
      $region47: #{gcn_forward.4} parent=39 // pred_region
        %v453 = vld [vmem:[#allocation2] sm:$0xff]
        %v454 = vld [vmem:[#allocation2 + $0x8] sm:$0xff]
        %v455 = vld [vmem:[#allocation2 + $0x10] sm:$0xff]
        %v456 = vld [vmem:[#allocation2 + $0x18] sm:$0xff]
        %v457 = vld [vmem:[#allocation2 + $0x20] sm:$0xff]
        %v458 = vld [vmem:[#allocation2 + $0x28] sm:$0xff]
        %v459 = vld [vmem:[#allocation2 + $0x30] sm:$0xff]
        %v460 = vld [vmem:[#allocation2 + $0x38] sm:$0xff]
        %v461 = vld [vmem:[%s265] sm:$0xff]
        %v462 = vld [vmem:[%s265 + $0x8] sm:$0xff]
        %v463 = vld [vmem:[%s265 + $0x10] sm:$0xff]
        %v464 = vld [vmem:[%s265 + $0x18] sm:$0xff]
        %v465 = vld [vmem:[%s265 + $0x20] sm:$0xff]
        %v466 = vld [vmem:[%s265 + $0x28] sm:$0xff]
        %v467 = vld [vmem:[%s265 + $0x30] sm:$0xff]
        %v468 = vld [vmem:[%s265 + $0x38] sm:$0xff]
        %470 = vset.pattern.permute.xlu0 0
        %471 = vperm.xlu0 %470, %v461
        %v472 = vpop.permute.xlu0 %471
        %475 = vset.pattern.permute.xlu0 0
        %476 = vperm.xlu0 %475, %v462
        %v477 = vpop.permute.xlu0 %476
        %480 = vset.pattern.permute.xlu0 0
        %481 = vperm.xlu0 %480, %v463
        %v482 = vpop.permute.xlu0 %481
        %485 = vset.pattern.permute.xlu0 0
        %486 = vperm.xlu0 %485, %v464
        %v487 = vpop.permute.xlu0 %486
        %490 = vset.pattern.permute.xlu0 0
        %491 = vperm.xlu0 %490, %v465
        %v492 = vpop.permute.xlu0 %491
        %495 = vset.pattern.permute.xlu0 0
        %496 = vperm.xlu0 %495, %v466
        %v497 = vpop.permute.xlu0 %496
        %500 = vset.pattern.permute.xlu0 0
        %501 = vperm.xlu0 %500, %v467
        %v502 = vpop.permute.xlu0 %501
        %505 = vset.pattern.permute.xlu0 0
        %506 = vperm.xlu0 %505, %v468
        %v507 = vpop.permute.xlu0 %506
        %v509 = vmul.f32 %v453, %v472
        %v510 = vmul.f32 %v454, %v477
        %v511 = vmul.f32 %v455, %v482
        %v512 = vmul.f32 %v456, %v487
        %v513 = vmul.f32 %v457, %v492
        %v514 = vmul.f32 %v458, %v497
        %v515 = vmul.f32 %v459, %v502
        %v516 = vmul.f32 %v460, %v507
        %v517 = vld [vmem:[%s3] sm:$0x1]
        %v519 = vlaneseq
        %v520 = vshrl.u32 %v519, 7
        %v521 = vsub.s32 0, %v520
        %v522 = vrot.slane %v517, %v521
        %v524 = vadd.f32 %v509, %v522
        %v525 = vadd.f32 %v510, %v522
        %v526 = vadd.f32 %v511, %v522
        %v527 = vadd.f32 %v512, %v522
        %v528 = vadd.f32 %v513, %v522
        %v529 = vadd.f32 %v514, %v522
        %v530 = vadd.f32 %v515, %v522
        %v531 = vadd.f32 %v516, %v522
        %v532 = vmax.f32 %v524, 0.0
        %v533 = vmax.f32 %v525, 0.0
        %v534 = vmax.f32 %v526, 0.0
        %v535 = vmax.f32 %v527, 0.0
        %v536 = vmax.f32 %v528, 0.0
        %v537 = vmax.f32 %v529, 0.0
        %v538 = vmax.f32 %v530, 0.0
        %v539 = vmax.f32 %v531, 0.0
        %v540 = vld [vmem:[%s4] sm:$0xff]
        %v541 = vld [vmem:[%s4 + $0x8] sm:$0xff]
        %v542 = vld [vmem:[%s4 + $0x10] sm:$0xff]
        %v543 = vld [vmem:[%s4 + $0x18] sm:$0xff]
        %v544 = vld [vmem:[%s4 + $0x20] sm:$0xff]
        %v545 = vld [vmem:[%s4 + $0x28] sm:$0xff]
        %v546 = vld [vmem:[%s4 + $0x30] sm:$0xff]
        %v547 = vld [vmem:[%s4 + $0x38] sm:$0xff]
        %v548 = vld [vmem:[%s4 + $0x40] sm:$0xff]
        %v549 = vld [vmem:[%s4 + $0x48] sm:$0xff]
        %v550 = vld [vmem:[%s4 + $0x50] sm:$0xff]
        %v551 = vld [vmem:[%s4 + $0x58] sm:$0xff]
        %v552 = vld [vmem:[%s4 + $0x60] sm:$0xff]
        %v553 = vld [vmem:[%s4 + $0x68] sm:$0xff]
        %v554 = vld [vmem:[%s4 + $0x70] sm:$0xff]
        %v555 = vld [vmem:[%s4 + $0x78] sm:$0xff]
        %556 = vmatprep.subr.mxu0 0.0
        %557 = vmatpush1.msra.mxu0 %v555
        %558 = vmatprep.subr.mxu0 0.0
        %559 = vmatpush1.msra.mxu0 %v554
        %560 = vmatprep.subr.mxu0 0.0
        %561 = vmatpush1.msra.mxu0 %v553
        %562 = vmatprep.subr.mxu0 0.0
        %563 = vmatpush1.msra.mxu0 %v552
        %564 = vmatprep.subr.mxu0 0.0
        %565 = vmatpush1.msra.mxu0 %v551
        %566 = vmatprep.subr.mxu0 0.0
        %567 = vmatpush1.msra.mxu0 %v550
        %568 = vmatprep.subr.mxu0 0.0
        %569 = vmatpush1.msra.mxu0 %v549
        %570 = vmatprep.subr.mxu0 0.0
        %571 = vmatpush1.msra.mxu0 %v548
        %572 = vmatprep.subr.mxu0 0.0
        %573 = vmatpush1.msra.mxu0 %v547
        %574 = vmatprep.subr.mxu0 0.0
        %575 = vmatpush1.msra.mxu0 %v546
        %576 = vmatprep.subr.mxu0 0.0
        %577 = vmatpush1.msra.mxu0 %v545
        %578 = vmatprep.subr.mxu0 0.0
        %579 = vmatpush1.msra.mxu0 %v544
        %580 = vmatprep.subr.mxu0 0.0
        %581 = vmatpush1.msra.mxu0 %v543
        %582 = vmatprep.subr.mxu0 0.0
        %583 = vmatpush1.msra.mxu0 %v542
        %584 = vmatprep.subr.mxu0 0.0
        %585 = vmatpush1.msra.mxu0 %v541
        %586 = vmatprep.subr.mxu0 0.0
        %587 = vmatpush1.msra.mxu0 %v540
        %588 = vmatprep.subr.mxu0 0.0
        %589 = vmatpush2.msra.mxu0 0.0
        %590 = vmatprep.subr.mxu0 0.0
        %591 = vmatpush2.msra.mxu0 0.0
        %592 = vmatprep.subr.mxu0 0.0
        %593 = vmatpush2.msra.mxu0 0.0
        %594 = vmatprep.subr.mxu0 0.0
        %595 = vmatpush2.msra.mxu0 0.0
        %596 = vmatprep.subr.mxu0 0.0
        %597 = vmatpush2.msra.mxu0 0.0
        %598 = vmatprep.subr.mxu0 0.0
        %599 = vmatpush2.msra.mxu0 0.0
        %600 = vmatprep.subr.mxu0 0.0
        %601 = vmatpush2.msra.mxu0 0.0
        %602 = vmatprep.subr.mxu0 0.0
        %603 = vmatpush2.msra.mxu0 0.0
        %604 = vmatprep.subr.mxu0 0.0
        %605 = vmatpush2.msra.mxu0 0.0
        %606 = vmatprep.subr.mxu0 0.0
        %607 = vmatpush2.msra.mxu0 0.0
        %608 = vmatprep.subr.mxu0 0.0
        %609 = vmatpush2.msra.mxu0 0.0
        %610 = vmatprep.subr.mxu0 0.0
        %611 = vmatpush2.msra.mxu0 0.0
        %612 = vmatprep.subr.mxu0 0.0
        %613 = vmatpush2.msra.mxu0 0.0
        %614 = vmatprep.subr.mxu0 0.0
        %615 = vmatpush2.msra.mxu0 0.0
        %616 = vmatprep.subr.mxu0 0.0
        %617 = vmatpush2.msra.mxu0 0.0
        %618 = vmatprep.subr.mxu0 0.0
        %619 = vmatpush2.msra.mxu0 0.0
        %620 = vmatprep.mubr.f32.mxu0 0.0
        %621 = vmatmul.mubr.f32.gmra.mxu0 %v532
        %v622 = vpop.f32.mrf.mxu0
        %v623 = vadd.f32 0.0, %v622
        %v624 = vpop.f32.mrf.mxu0
        %625 = vmatprep.mubr.f32.mxu0 0.0
        %626 = vmatmul.mubr.f32.gmra.mxu0 %v533
        %v627 = vpop.f32.mrf.mxu0
        %v628 = vadd.f32 0.0, %v627
        %v629 = vpop.f32.mrf.mxu0
        %630 = vmatprep.mubr.f32.mxu0 0.0
        %631 = vmatmul.mubr.f32.gmra.mxu0 %v534
        %v632 = vpop.f32.mrf.mxu0
        %v633 = vadd.f32 0.0, %v632
        %v634 = vpop.f32.mrf.mxu0
        %635 = vmatprep.mubr.f32.mxu0 0.0
        %636 = vmatmul.mubr.f32.gmra.mxu0 %v535
        %v637 = vpop.f32.mrf.mxu0
        %v638 = vadd.f32 0.0, %v637
        %v639 = vpop.f32.mrf.mxu0
        %640 = vmatprep.mubr.f32.mxu0 0.0
        %641 = vmatmul.mubr.f32.gmra.mxu0 %v536
        %v642 = vpop.f32.mrf.mxu0
        %v643 = vadd.f32 0.0, %v642
        %v644 = vpop.f32.mrf.mxu0
        %645 = vmatprep.mubr.f32.mxu0 0.0
        %646 = vmatmul.mubr.f32.gmra.mxu0 %v537
        %v647 = vpop.f32.mrf.mxu0
        %v648 = vadd.f32 0.0, %v647
        %v649 = vpop.f32.mrf.mxu0
        %650 = vmatprep.mubr.f32.mxu0 0.0
        %651 = vmatmul.mubr.f32.gmra.mxu0 %v538
        %v652 = vpop.f32.mrf.mxu0
        %v653 = vadd.f32 0.0, %v652
        %v654 = vpop.f32.mrf.mxu0
        %655 = vmatprep.mubr.f32.mxu0 0.0
        %656 = vmatmul.mubr.f32.gmra.mxu0 %v539
        %v657 = vpop.f32.mrf.mxu0
        %v658 = vadd.f32 0.0, %v657
        %v659 = vpop.f32.mrf.mxu0
        %660 = vdwg.mxu0
        %v661 = vmul.f32 %v623, %v472
        %v662 = vmul.f32 %v628, %v477
        %v663 = vmul.f32 %v633, %v482
        %v664 = vmul.f32 %v638, %v487
        %v665 = vmul.f32 %v643, %v492
        %v666 = vmul.f32 %v648, %v497
        %v667 = vmul.f32 %v653, %v502
        %v668 = vmul.f32 %v658, %v507
        %v669 = vpack.c.bf16 %v662, %v661
        %v670 = vpack.c.bf16 %v664, %v663
        %v671 = vpack.c.bf16 %v666, %v665
        %v672 = vpack.c.bf16 %v668, %v667
        %v677 = vunpack.c.l.b16 %v669
        %v678 = vunpack.c.h.b16 %v669
        %v679 = vunpack.c.l.b16 %v670
        %v680 = vunpack.c.h.b16 %v670
        %v681 = vunpack.c.l.b16 %v671
        %v682 = vunpack.c.h.b16 %v671
        %v683 = vunpack.c.l.b16 %v672
        %v684 = vunpack.c.h.b16 %v672
        %v685 = vpack.c.b16 %v677, %v677
        %v686 = vpack.c.b16 %v678, %v678
        %v687 = vpack.c.b16 %v679, %v679
        %v688 = vpack.c.b16 %v680, %v680
        %v689 = vpack.c.b16 %v681, %v681
        %v690 = vpack.c.b16 %v682, %v682
        %v691 = vpack.c.b16 %v683, %v683
        %v692 = vpack.c.b16 %v684, %v684
        %701 = vst [vmem:[%s271] sm:$0xf] %v685
        %702 = vst [vmem:[%s271 + $0x4] sm:$0xf] %v686
        %703 = vst [vmem:[%s271 + $0x8] sm:$0xf] %v687
        %704 = vst [vmem:[%s271 + $0xc] sm:$0xf] %v688
        %705 = vst [vmem:[%s271 + $0x10] sm:$0xf] %v689
        %706 = vst [vmem:[%s271 + $0x14] sm:$0xf] %v690
        %707 = vst [vmem:[%s271 + $0x18] sm:$0xf] %v691
        %708 = vst [vmem:[%s271 + $0x1c] sm:$0xf] %v692
      $region48: #{gcn_forward.4} parent=39 // pred_fallthru
        _
      %s709 = smul.u32 8, %s20
      %p710 = scmp.lt.s32.totalorder %s709, 15
      %s711 = scalar_select %p710, %s709, 15
      %s712 = smul.addr %s711, 4
      %s713 = scalar_lea.vmem %s5, %s712
      // Predicated region
      $region49: #{gcn_forward.4} parent=39 // pred_check
        %p714 = pneg %p163
      $region50: #{gcn_forward.4} parent=39 // pred_check_branch
        %716 = sbr.rel (%p714) target = $region52
      $region51: #{gcn_forward.4} parent=39 // pred_region
        %s717 = smul.u32 8, %s20
      $region52: #{gcn_forward.4} parent=39 // pred_fallthru
        _
    $region40: #{gcn_forward.4} parent=5 // pred_fallthru
      _
    %p718 = scmp.le.s32.totalorder 2, %s11
    // Predicated region
    $region53: #{gcn_forward.4} parent=5 // pred_check
      %p719 = pneg %p718
    $region54: #{gcn_forward.4} parent=5 // pred_check_branch
      %721 = sbr.rel (%p719) target = $region56
    $region55: #{gcn_forward.4} parent=5 // pred_region
      %s722 = ssub.s32 %s11, 2
      // Predicated region
      $region57: #{gcn_forward.4} parent=55 // pred_check
        %p723 = pneg %p169
      $region58: #{gcn_forward.4} parent=55 // pred_check_branch
        %725 = sbr.rel (%p723) target = $region60
      $region59: #{gcn_forward.4} parent=55 // pred_region
        %s726 = smul.u32 8, %s22
        %p727 = scmp.lt.s32.totalorder %s726, 15
        %s728 = scalar_select %p727, %s726, 15
        %s729 = smul.addr %s728, 4
        %s730 = scalar_lea.vmem %s5, %s729
      $region60: #{gcn_forward.4} parent=55 // pred_fallthru
        _
    $region56: #{gcn_forward.4} parent=5 // pred_fallthru
      _
  $region6: #{gcn_forward.4} parent=0 // loop_footer
    %s15 = sadd.s32 1, %s11
  $region7: #{gcn_forward.4} parent=0 // loop_footer_branch
    %10 = sbr.rel target = $region3
  $region8: #{gcn_forward.4} parent=0 // loop_exit
    _

</llo_original>
